<compile_context>
chip_gen: v5e
topology: v5e:2x2
jax: 0.10.0
libtpu: 0.0.40
codegen_flags: <defaults>
</compile_context>

<pallas_src>
import functools
import math

import jax
import jax.numpy as jnp
from jax.experimental import pallas as pl
from jax.experimental.pallas import tpu as pltpu

LANE = 128
SUBLANE_F32 = 8
SUBLANE_BF16 = 16   # bf16 sublane pack


def _round_up(n, m):
    return ((n + m - 1) // m) * m


# ------------------------------ layer config --------------------------------

def layer_config(n_features, embedding_dim):
    """Returns ([(fan_in, fan_out, mode), ...], n_encoder_layers)."""
    e = embedding_dim
    enc_sizes = [n_features, e * 30, e * 20, e * 20, e * 10, e]
    dec_sizes = [e, e * 10, e * 20, e * 20, e * 30, n_features]

    layers = []
    n_enc = len(enc_sizes) - 1
    for i, (fi, fo) in enumerate(zip(enc_sizes[:-1], enc_sizes[1:])):
        layers.append((fi, fo, "bn_relu" if i < n_enc - 1 else "relu"))
    n_dec = len(dec_sizes) - 1
    for i, (fi, fo) in enumerate(zip(dec_sizes[:-1], dec_sizes[1:])):
        layers.append((fi, fo, "relu_bn" if i < n_dec - 1 else "sigmoid"))
    return layers, n_enc


# --------------------------- parameter construction -------------------------

def init_linear(key, fan_in, fan_out):
    """PyTorch nn.Linear default init: U(-1/sqrt(fan_in), 1/sqrt(fan_in)).
    Weight stored as (in, out) so the kernel computes y = x @ W + b."""
    kw, kb = jax.random.split(key)
    bound = 1.0 / math.sqrt(fan_in)
    w = jax.random.uniform(kw, (fan_in, fan_out), jnp.float32, -bound, bound)
    b = jax.random.uniform(kb, (1, fan_out), jnp.float32, -bound, bound)
    return w, b


def init_bn_affine(key, n, eps=1e-5):
    """BatchNorm1d (eval mode) folded into per-feature scale/shift."""
    k1, k2, k3, k4 = jax.random.split(key, 4)
    gamma = 1.0 + 0.1 * jax.random.normal(k1, (1, n), jnp.float32)
    beta = 0.1 * jax.random.normal(k2, (1, n), jnp.float32)
    run_mean = 0.1 * jax.random.normal(k3, (1, n), jnp.float32)
    run_var = 1.0 + 0.1 * jax.random.uniform(k4, (1, n), jnp.float32)
    scale = gamma / jnp.sqrt(run_var + eps)
    shift = beta - run_mean * scale
    return scale, shift


def build_params(key, layers):
    """True-shaped f32 params, matching the PyTorch module layout."""
    params = []
    for fi, fo, mode in layers:
        key, k1, k2 = jax.random.split(key, 3)
        w, b = init_linear(k1, fi, fo)
        if mode in ("bn_relu", "relu_bn"):
            scale, shift = init_bn_affine(k2, fo)
            params.append((w, b, scale, shift))
        else:
            params.append((w, b))
    return params


def fold_batchnorm(layers, params):
    """Fold eval-mode BatchNorm affines into the Linear weights/biases.

    Done in f32 on the unpadded params (exact algebra, before bf16 casting):
      encoder "bn_relu": relu(BN(xW+b))       -> relu(x(W*s) + (b*s+sh))
      decoder "relu_bn": y=BN(relu(xW_i+b_i)); y W_n + b_n
                                              -> relu(..) (diag(s) W_n) + (sh W_n + b_n)
    After folding every layer is plain relu(x@W+b) (sigmoid for the last).
    """
    hi = jax.lax.Precision.HIGHEST
    folded = [[p[0], p[1]] for p in params]
    for i, ((_fi, _fo, mode), p) in enumerate(zip(layers, params)):
        if mode == "bn_relu":                       # fold into OWN linear
            s, sh = p[2], p[3]                      # (1, fo)
            folded[i][0] = folded[i][0] * s         # column scale
            folded[i][1] = folded[i][1] * s + sh
        elif mode == "relu_bn":                     # fold forward into NEXT linear
            s, sh = p[2], p[3]
            w_next, b_next = folded[i + 1]
            new_b = b_next + jnp.dot(sh, w_next, precision=hi)
            new_w = s.reshape(-1, 1) * w_next       # row scale
            folded[i + 1] = [new_w, new_b]
    return [tuple(f) for f in folded]


def padded_dims(layers, n_enc):
    """Padded (fan_in, fan_out) per layer.

    fan_out (lane dim of W and of the layer output) is 128-aligned, except the
    8-wide bottleneck which only needs the bf16 sublane pack (16).
    fan_in of layer i is chained to the padded fan_out of layer i-1 (layer 0's
    fan_in only needs the bf16 sublane pack).
    """
    fo_pads = []
    for i, (_fi, fo, _mode) in enumerate(layers):
        if i == n_enc - 1:                          # bottleneck stays narrow
            fo_pads.append(_round_up(fo, SUBLANE_BF16))
        else:
            fo_pads.append(_round_up(fo, LANE))
    fi_pads = [_round_up(layers[0][0], SUBLANE_BF16)] + fo_pads[:-1]
    return fi_pads, fo_pads


def pad_and_pack_params(layers, folded_params, fi_pads, fo_pads):
    """Zero-pad weights (-> bf16) and merge all biases into one f32 buffer."""
    max_fo = max(fo_pads)
    ws = []
    b_all = jnp.zeros((len(layers), max_fo), jnp.float32)
    for i, ((fi, fo, _mode), (w, b)) in enumerate(zip(layers, folded_params)):
        fi_p, fo_p = fi_pads[i], fo_pads[i]
        w_p = (jnp.zeros((fi_p, fo_p), jnp.float32)
               .at[:fi, :fo].set(w)
               .astype(jnp.bfloat16))
        ws.append(w_p)
        b_all = b_all.at[i, :fo].set(b.reshape(-1))
    return tuple(ws), b_all


# ------------------------------- Pallas kernel ------------------------------

def _fc_autoencoder_kernel(*refs, fo_pads, n_enc):
    """Fully fused forward: 10 chained (bf16 matmul + f32 bias + act) stages.

    refs = (x_ref, w_0..w_{L-1}, b_all_ref, enc_out_ref, dec_out_ref)
    """
    n_layers = len(fo_pads)
    x_ref = refs[0]
    w_refs = refs[1:1 + n_layers]
    b_all_ref = refs[1 + n_layers]
    enc_out_ref = refs[2 + n_layers]
    dec_out_ref = refs[3 + n_layers]

    h = x_ref[...]                                           # f32 activations
    for li in range(n_layers):
        fo_p = fo_pads[li]
        w = w_refs[li][...]                                  # bf16 (fi_p, fo_p)
        b = b_all_ref[pl.ds(li, 1), pl.ds(0, fo_p)]          # f32 (1, fo_p), static slice
        y = jnp.dot(h.astype(jnp.bfloat16), w,
                    preferred_element_type=jnp.float32) + b  # f32 accumulate
        if li == n_layers - 1:
            y = jax.nn.sigmoid(y)                            # decoder output layer
        else:
            y = jnp.maximum(y, 0.0)                          # hidden layers (BN folded)
        h = y
        if li == n_enc - 1:                                  # bottleneck -> encoded
            enc_out_ref[...] = h
    dec_out_ref[...] = h


def make_fused_forward(layers, n_enc, batch, fi_pads, fo_pads):
    """Builds a jitted forward(x, w_padded, b_all) -> (encoded, decoded)."""
    n_layers = len(layers)
    n_in = layers[0][0]
    enc_dim = layers[n_enc - 1][1]
    dec_dim = layers[-1][1]
    n_in_p = fi_pads[0]
    enc_dim_p = fo_pads[n_enc - 1]
    dec_dim_p = fo_pads[-1]
    batch_p = _round_up(batch, SUBLANE_F32)
    max_fo_p = max(fo_pads)

    vmem = pl.BlockSpec(memory_space=pltpu.MemorySpace.VMEM)
    num_inputs = 1 + n_layers + 1                    # x + weights + bias blob

    # Advisory cost estimate (padded sizes, bf16 weights).
    flops = sum(2 * batch_p * fi * fo for fi, fo in zip(fi_pads, fo_pads))
    transcendentals = batch_p * dec_dim_p            # final sigmoid
    bytes_accessed = (
        2 * sum(fi * fo for fi, fo in zip(fi_pads, fo_pads))          # bf16 weights
        + 4 * (batch_p * n_in_p                                       # x
               + n_layers * max_fo_p                                  # bias blob
               + batch_p * (enc_dim_p + dec_dim_p)))                  # outputs

    fused = pl.pallas_call(
        functools.partial(_fc_autoencoder_kernel,
                          fo_pads=tuple(fo_pads), n_enc=n_enc),
        out_shape=(jax.ShapeDtypeStruct((batch_p, enc_dim_p), jnp.float32),
                   jax.ShapeDtypeStruct((batch_p, dec_dim_p), jnp.float32)),
        in_specs=[vmem] * num_inputs,
        out_specs=(vmem, vmem),
        cost_estimate=pl.CostEstimate(flops=flops,
                                      transcendentals=transcendentals,
                                      bytes_accessed=bytes_accessed),
    )

    def forward(x, w_padded, b_all):
        if x.shape != (batch_p, n_in_p):
            x_p = jnp.zeros((batch_p, n_in_p), jnp.float32).at[:batch, :n_in].set(x)
        else:
            x_p = x
        enc_p, dec_p = fused(x_p, *w_padded, b_all)
        return enc_p[:batch, :enc_dim], dec_p[:batch, :dec_dim]

    return jax.jit(forward)


# ------------------------ plain-JAX reference (check) -----------------------

def reference_forward(x, layers, params, n_enc):
    """f32 reference with the ORIGINAL (unfolded) BatchNorm semantics."""
    hi = jax.lax.Precision.HIGHEST
    h = x
    encoded = None
    for li, ((_fi, _fo, mode), p) in enumerate(zip(layers, params)):
        y = jnp.dot(h, p[0], precision=hi) + p[1]
        if mode == "bn_relu":
            y = jnp.maximum(y * p[2] + p[3], 0.0)
        elif mode == "relu_bn":
            y = jnp.maximum(y, 0.0) * p[2] + p[3]
        elif mode == "relu":
            y = jnp.maximum(y, 0.0)
        else:
            y = jax.nn.sigmoid(y)
        h = y
        if li == n_enc - 1:
            encoded = h
    return encoded, h


# ----------------------------------- main ------------------------------------

if __name__ == "__main__":
    n_features = 32
    embedding_dim = 8
    batch = 16

    layers, n_enc = layer_config(n_features, embedding_dim)

    root = jax.random.PRNGKey(0)
    kx, kp = jax.random.split(root)
    x = jax.random.uniform(kx, (batch, n_features), jnp.float32)
    params = build_params(kp, layers)

    # Parameter prep: fold BN (f32, exact) -> pad -> bf16 weights + merged biases.
    folded = fold_batchnorm(layers, params)
    fi_pads, fo_pads = padded_dims(layers, n_enc)
    w_padded, b_all = pad_and_pack_params(layers, folded, fi_pads, fo_pads)

    fwd = make_fused_forward(layers, n_enc, batch, fi_pads, fo_pads)
    encoded, decoded = fwd(x, w_padded, b_all)
    jax.block_until_ready((encoded, decoded))

    # Shape / dtype / range sanity.
    assert encoded.shape == (batch, embedding_dim), encoded.shape
    assert decoded.shape == (batch, n_features), decoded.shape
    assert encoded.dtype == jnp.float32 and decoded.dtype == jnp.float32
    assert bool(jnp.all(encoded >= 0.0))                             # post-relu
    assert bool(jnp.all(decoded >= 0.0) & jnp.all(decoded <= 1.0))   # post-sigmoid

    # Numerical check vs. f32 plain-JAX reference with unfolded BatchNorm.
    # Tolerance covers bf16 matmul operands over 10 chained layers.
    enc_ref, dec_ref = reference_forward(x, layers, params, n_enc)
    assert bool(jnp.allclose(encoded, enc_ref, atol=5e-2, rtol=5e-2))
    assert bool(jnp.allclose(decoded, dec_ref, atol=5e-2, rtol=5e-2))

    print("KERNEL_OK")
</pallas_src>

<mosaic_0001>
module attributes {stable_mosaic.version = 11 : i64} {
  func.func @_fc_autoencoder_kernel(%arg0: memref<16x32xf32, #tpu.memory_space<vmem>>, %arg1: memref<32x256xbf16, #tpu.memory_space<vmem>>, %arg2: memref<256x256xbf16, #tpu.memory_space<vmem>>, %arg3: memref<256x256xbf16, #tpu.memory_space<vmem>>, %arg4: memref<256x128xbf16, #tpu.memory_space<vmem>>, %arg5: memref<128x16xbf16, #tpu.memory_space<vmem>>, %arg6: memref<16x128xbf16, #tpu.memory_space<vmem>>, %arg7: memref<128x256xbf16, #tpu.memory_space<vmem>>, %arg8: memref<256x256xbf16, #tpu.memory_space<vmem>>, %arg9: memref<256x256xbf16, #tpu.memory_space<vmem>>, %arg10: memref<256x128xbf16, #tpu.memory_space<vmem>>, %arg11: memref<10x256xf32, #tpu.memory_space<vmem>>, %arg12: memref<16x16xf32, #tpu.memory_space<vmem>>, %arg13: memref<16x128xf32, #tpu.memory_space<vmem>>) attributes {dimension_semantics = [], scalar_prefetch = 0 : i64, scratch_operands = 0 : i64, tpu.core_type = #tpu.core_type<tc>} {
    %c0 = arith.constant 0 : index
    %c0_0 = arith.constant 0 : index
    %0 = vector.load %arg0[%c0, %c0_0] : memref<16x32xf32, #tpu.memory_space<vmem>>, vector<16x32xf32>
    %c0_1 = arith.constant 0 : index
    %c0_2 = arith.constant 0 : index
    %1 = vector.load %arg1[%c0_1, %c0_2] : memref<32x256xbf16, #tpu.memory_space<vmem>>, vector<32x256xbf16>
    %c0_3 = arith.constant 0 : index
    %c0_4 = arith.constant 0 : index
    %2 = vector.load %arg11[%c0_3, %c0_4] : memref<10x256xf32, #tpu.memory_space<vmem>>, vector<1x256xf32>
    %3 = arith.truncf %0 : vector<16x32xf32> to vector<16x32xbf16>
    %cst = arith.constant dense<0.000000e+00> : vector<16x256xf32>
    %4 = tpu.matmul %3, %1, %cst {dimension_numbers = #tpu.dot_dimension_numbers<[1], [0], [0], [1], [0, 0, 1, 1], [], []>} : vector<16x32xbf16>, vector<32x256xbf16>, vector<16x256xf32> -> vector<16x256xf32>
    %5 = vector.broadcast %2 : vector<1x256xf32> to vector<16x256xf32>
    %6 = arith.addf %4, %5 : vector<16x256xf32>
    %cst_5 = arith.constant 0.000000e+00 : f32
    %7 = vector.broadcast %cst_5 : f32 to vector<16x256xf32>
    %8 = arith.maximumf %6, %7 : vector<16x256xf32>
    %c0_6 = arith.constant 0 : index
    %c0_7 = arith.constant 0 : index
    %9 = vector.load %arg2[%c0_6, %c0_7] : memref<256x256xbf16, #tpu.memory_space<vmem>>, vector<256x256xbf16>
    %c1 = arith.constant 1 : index
    %c0_8 = arith.constant 0 : index
    %10 = vector.load %arg11[%c1, %c0_8] : memref<10x256xf32, #tpu.memory_space<vmem>>, vector<1x256xf32>
    %11 = arith.truncf %8 : vector<16x256xf32> to vector<16x256xbf16>
    %cst_9 = arith.constant dense<0.000000e+00> : vector<16x256xf32>
    %12 = tpu.matmul %11, %9, %cst_9 {dimension_numbers = #tpu.dot_dimension_numbers<[1], [0], [0], [1], [0, 0, 1, 1], [], []>} : vector<16x256xbf16>, vector<256x256xbf16>, vector<16x256xf32> -> vector<16x256xf32>
    %13 = vector.broadcast %10 : vector<1x256xf32> to vector<16x256xf32>
    %14 = arith.addf %12, %13 : vector<16x256xf32>
    %cst_10 = arith.constant 0.000000e+00 : f32
    %15 = vector.broadcast %cst_10 : f32 to vector<16x256xf32>
    %16 = arith.maximumf %14, %15 : vector<16x256xf32>
    %c0_11 = arith.constant 0 : index
    %c0_12 = arith.constant 0 : index
    %17 = vector.load %arg3[%c0_11, %c0_12] : memref<256x256xbf16, #tpu.memory_space<vmem>>, vector<256x256xbf16>
    %c2 = arith.constant 2 : index
    %c0_13 = arith.constant 0 : index
    %18 = vector.load %arg11[%c2, %c0_13] : memref<10x256xf32, #tpu.memory_space<vmem>>, vector<1x256xf32>
    %19 = arith.truncf %16 : vector<16x256xf32> to vector<16x256xbf16>
    %cst_14 = arith.constant dense<0.000000e+00> : vector<16x256xf32>
    %20 = tpu.matmul %19, %17, %cst_14 {dimension_numbers = #tpu.dot_dimension_numbers<[1], [0], [0], [1], [0, 0, 1, 1], [], []>} : vector<16x256xbf16>, vector<256x256xbf16>, vector<16x256xf32> -> vector<16x256xf32>
    %21 = vector.broadcast %18 : vector<1x256xf32> to vector<16x256xf32>
    %22 = arith.addf %20, %21 : vector<16x256xf32>
    %cst_15 = arith.constant 0.000000e+00 : f32
    %23 = vector.broadcast %cst_15 : f32 to vector<16x256xf32>
    %24 = arith.maximumf %22, %23 : vector<16x256xf32>
    %c0_16 = arith.constant 0 : index
    %c0_17 = arith.constant 0 : index
    %25 = vector.load %arg4[%c0_16, %c0_17] : memref<256x128xbf16, #tpu.memory_space<vmem>>, vector<256x128xbf16>
    %c3 = arith.constant 3 : index
    %c0_18 = arith.constant 0 : index
    %26 = vector.load %arg11[%c3, %c0_18] : memref<10x256xf32, #tpu.memory_space<vmem>>, vector<1x128xf32>
    %27 = arith.truncf %24 : vector<16x256xf32> to vector<16x256xbf16>
    %cst_19 = arith.constant dense<0.000000e+00> : vector<16x128xf32>
    %28 = tpu.matmul %27, %25, %cst_19 {dimension_numbers = #tpu.dot_dimension_numbers<[1], [0], [0], [1], [0, 0, 1, 1], [], []>} : vector<16x256xbf16>, vector<256x128xbf16>, vector<16x128xf32> -> vector<16x128xf32>
    %29 = vector.broadcast %26 : vector<1x128xf32> to vector<16x128xf32>
    %30 = arith.addf %28, %29 : vector<16x128xf32>
    %cst_20 = arith.constant 0.000000e+00 : f32
    %31 = vector.broadcast %cst_20 : f32 to vector<16x128xf32>
    %32 = arith.maximumf %30, %31 : vector<16x128xf32>
    %c0_21 = arith.constant 0 : index
    %c0_22 = arith.constant 0 : index
    %33 = vector.load %arg5[%c0_21, %c0_22] : memref<128x16xbf16, #tpu.memory_space<vmem>>, vector<128x16xbf16>
    %c4 = arith.constant 4 : index
    %c0_23 = arith.constant 0 : index
    %34 = vector.load %arg11[%c4, %c0_23] : memref<10x256xf32, #tpu.memory_space<vmem>>, vector<1x16xf32>
    %35 = arith.truncf %32 : vector<16x128xf32> to vector<16x128xbf16>
    %cst_24 = arith.constant dense<0.000000e+00> : vector<16x16xf32>
    %36 = tpu.matmul %35, %33, %cst_24 {dimension_numbers = #tpu.dot_dimension_numbers<[1], [0], [0], [1], [0, 0, 1, 1], [], []>} : vector<16x128xbf16>, vector<128x16xbf16>, vector<16x16xf32> -> vector<16x16xf32>
    %37 = vector.broadcast %34 : vector<1x16xf32> to vector<16x16xf32>
    %38 = arith.addf %36, %37 : vector<16x16xf32>
    %cst_25 = arith.constant 0.000000e+00 : f32
    %39 = vector.broadcast %cst_25 : f32 to vector<16x16xf32>
    %40 = arith.maximumf %38, %39 : vector<16x16xf32>
    %c0_26 = arith.constant 0 : index
    %c0_27 = arith.constant 0 : index
    %41 = vector.load %arg12[%c0_26, %c0_27] : memref<16x16xf32, #tpu.memory_space<vmem>>, vector<16x16xf32>
    tpu.vector_store %arg12[%c0_26, %c0_27], %40 {strides = array<i32>} : memref<16x16xf32, #tpu.memory_space<vmem>>, vector<16x16xf32>,
    %c0_28 = arith.constant 0 : index
    %c0_29 = arith.constant 0 : index
    %42 = vector.load %arg6[%c0_28, %c0_29] : memref<16x128xbf16, #tpu.memory_space<vmem>>, vector<16x128xbf16>
    %c5 = arith.constant 5 : index
    %c0_30 = arith.constant 0 : index
    %43 = vector.load %arg11[%c5, %c0_30] : memref<10x256xf32, #tpu.memory_space<vmem>>, vector<1x128xf32>
    %44 = arith.truncf %40 : vector<16x16xf32> to vector<16x16xbf16>
    %cst_31 = arith.constant dense<0.000000e+00> : vector<16x128xf32>
    %45 = tpu.matmul %44, %42, %cst_31 {dimension_numbers = #tpu.dot_dimension_numbers<[1], [0], [0], [1], [0, 0, 1, 1], [], []>} : vector<16x16xbf16>, vector<16x128xbf16>, vector<16x128xf32> -> vector<16x128xf32>
    %46 = vector.broadcast %43 : vector<1x128xf32> to vector<16x128xf32>
    %47 = arith.addf %45, %46 : vector<16x128xf32>
    %cst_32 = arith.constant 0.000000e+00 : f32
    %48 = vector.broadcast %cst_32 : f32 to vector<16x128xf32>
    %49 = arith.maximumf %47, %48 : vector<16x128xf32>
    %c0_33 = arith.constant 0 : index
    %c0_34 = arith.constant 0 : index
    %50 = vector.load %arg7[%c0_33, %c0_34] : memref<128x256xbf16, #tpu.memory_space<vmem>>, vector<128x256xbf16>
    %c6 = arith.constant 6 : index
    %c0_35 = arith.constant 0 : index
    %51 = vector.load %arg11[%c6, %c0_35] : memref<10x256xf32, #tpu.memory_space<vmem>>, vector<1x256xf32>
    %52 = arith.truncf %49 : vector<16x128xf32> to vector<16x128xbf16>
    %cst_36 = arith.constant dense<0.000000e+00> : vector<16x256xf32>
    %53 = tpu.matmul %52, %50, %cst_36 {dimension_numbers = #tpu.dot_dimension_numbers<[1], [0], [0], [1], [0, 0, 1, 1], [], []>} : vector<16x128xbf16>, vector<128x256xbf16>, vector<16x256xf32> -> vector<16x256xf32>
    %54 = vector.broadcast %51 : vector<1x256xf32> to vector<16x256xf32>
    %55 = arith.addf %53, %54 : vector<16x256xf32>
    %cst_37 = arith.constant 0.000000e+00 : f32
    %56 = vector.broadcast %cst_37 : f32 to vector<16x256xf32>
    %57 = arith.maximumf %55, %56 : vector<16x256xf32>
    %c0_38 = arith.constant 0 : index
    %c0_39 = arith.constant 0 : index
    %58 = vector.load %arg8[%c0_38, %c0_39] : memref<256x256xbf16, #tpu.memory_space<vmem>>, vector<256x256xbf16>
    %c7 = arith.constant 7 : index
    %c0_40 = arith.constant 0 : index
    %59 = vector.load %arg11[%c7, %c0_40] : memref<10x256xf32, #tpu.memory_space<vmem>>, vector<1x256xf32>
    %60 = arith.truncf %57 : vector<16x256xf32> to vector<16x256xbf16>
    %cst_41 = arith.constant dense<0.000000e+00> : vector<16x256xf32>
    %61 = tpu.matmul %60, %58, %cst_41 {dimension_numbers = #tpu.dot_dimension_numbers<[1], [0], [0], [1], [0, 0, 1, 1], [], []>} : vector<16x256xbf16>, vector<256x256xbf16>, vector<16x256xf32> -> vector<16x256xf32>
    %62 = vector.broadcast %59 : vector<1x256xf32> to vector<16x256xf32>
    %63 = arith.addf %61, %62 : vector<16x256xf32>
    %cst_42 = arith.constant 0.000000e+00 : f32
    %64 = vector.broadcast %cst_42 : f32 to vector<16x256xf32>
    %65 = arith.maximumf %63, %64 : vector<16x256xf32>
    %c0_43 = arith.constant 0 : index
    %c0_44 = arith.constant 0 : index
    %66 = vector.load %arg9[%c0_43, %c0_44] : memref<256x256xbf16, #tpu.memory_space<vmem>>, vector<256x256xbf16>
    %c8 = arith.constant 8 : index
    %c0_45 = arith.constant 0 : index
    %67 = vector.load %arg11[%c8, %c0_45] : memref<10x256xf32, #tpu.memory_space<vmem>>, vector<1x256xf32>
    %68 = arith.truncf %65 : vector<16x256xf32> to vector<16x256xbf16>
    %cst_46 = arith.constant dense<0.000000e+00> : vector<16x256xf32>
    %69 = tpu.matmul %68, %66, %cst_46 {dimension_numbers = #tpu.dot_dimension_numbers<[1], [0], [0], [1], [0, 0, 1, 1], [], []>} : vector<16x256xbf16>, vector<256x256xbf16>, vector<16x256xf32> -> vector<16x256xf32>
    %70 = vector.broadcast %67 : vector<1x256xf32> to vector<16x256xf32>
    %71 = arith.addf %69, %70 : vector<16x256xf32>
    %cst_47 = arith.constant 0.000000e+00 : f32
    %72 = vector.broadcast %cst_47 : f32 to vector<16x256xf32>
    %73 = arith.maximumf %71, %72 : vector<16x256xf32>
    %c0_48 = arith.constant 0 : index
    %c0_49 = arith.constant 0 : index
    %74 = vector.load %arg10[%c0_48, %c0_49] : memref<256x128xbf16, #tpu.memory_space<vmem>>, vector<256x128xbf16>
    %c9 = arith.constant 9 : index
    %c0_50 = arith.constant 0 : index
    %75 = vector.load %arg11[%c9, %c0_50] : memref<10x256xf32, #tpu.memory_space<vmem>>, vector<1x128xf32>
    %76 = arith.truncf %73 : vector<16x256xf32> to vector<16x256xbf16>
    %cst_51 = arith.constant dense<0.000000e+00> : vector<16x128xf32>
    %77 = tpu.matmul %76, %74, %cst_51 {dimension_numbers = #tpu.dot_dimension_numbers<[1], [0], [0], [1], [0, 0, 1, 1], [], []>} : vector<16x256xbf16>, vector<256x128xbf16>, vector<16x128xf32> -> vector<16x128xf32>
    %78 = vector.broadcast %75 : vector<1x128xf32> to vector<16x128xf32>
    %79 = arith.addf %77, %78 : vector<16x128xf32>
    %80 = arith.negf %79 : vector<16x128xf32>
    %81 = math.exp %80 : vector<16x128xf32>
    %cst_52 = arith.constant 1.000000e+00 : f32
    %82 = vector.broadcast %cst_52 : f32 to vector<16x128xf32>
    %83 = arith.addf %82, %81 : vector<16x128xf32>
    %84 = arith.divf %82, %83 : vector<16x128xf32>
    %c0_53 = arith.constant 0 : index
    %c0_54 = arith.constant 0 : index
    %85 = vector.load %arg13[%c0_53, %c0_54] : memref<16x128xf32, #tpu.memory_space<vmem>>, vector<16x128xf32>
    tpu.vector_store %arg13[%c0_53, %c0_54], %84 {strides = array<i32>} : memref<16x128xf32, #tpu.memory_space<vmem>>, vector<16x128xf32>,
    return
  }
}

</mosaic_0001>

<llo_original>
// kernel: forward.1
$region0: #{forward.1}
  #allocation0 [shape = 'u32[]', space=smem, size = 0x4, offset = 0x4, fixed_abs, tag = 'smem constant byte address 0x4 - core index']
  #allocation1 [shape = 'u32[72,128]{1,0:T(1,128)}', space=vmem, size = 0x9000, scoped, tag = 'internal scratch']
  %s0 = inlined_call_operand.hbm [shape: f32[16,32], index: 0, kind: input, shape index: {}]
  %s1 = inlined_call_operand.vmem [shape: bf16[32,256], index: 1, kind: input, shape index: {}]
  %s2 = inlined_call_operand.hbm [shape: bf16[256,256], index: 2, kind: input, shape index: {}]
  %s3 = inlined_call_operand.hbm [shape: bf16[256,256], index: 3, kind: input, shape index: {}]
  %s4 = inlined_call_operand.hbm [shape: bf16[256,128], index: 4, kind: input, shape index: {}]
  %s5 = inlined_call_operand.vmem [shape: bf16[128,16], index: 5, kind: input, shape index: {}]
  %s6 = inlined_call_operand.vmem [shape: bf16[16,128], index: 6, kind: input, shape index: {}]
  %s7 = inlined_call_operand.hbm [shape: bf16[128,256], index: 7, kind: input, shape index: {}]
  %s8 = inlined_call_operand.hbm [shape: bf16[256,256], index: 8, kind: input, shape index: {}]
  %s9 = inlined_call_operand.hbm [shape: bf16[256,256], index: 9, kind: input, shape index: {}]
  %s10 = inlined_call_operand.hbm [shape: bf16[256,128], index: 10, kind: input, shape index: {}]
  %s11 = inlined_call_operand.vmem [shape: f32[10,256], index: 11, kind: input, shape index: {}]
  %s12 = inlined_call_operand.vmem [shape: f32[16,16], index: 12, kind: output, shape index: {0}]
  %s13 = inlined_call_operand.hbm [shape: f32[16,128], index: 13, kind: output, shape index: {1}]
  %14 = xla_tuple %s12, %s13
  %s15 = sld [smem:[#allocation0]]
  $region98: #{forward.1} parent=0
    _
  %s17 = ssub.s32 1, %s15
  %s18 = scalar_select 0, %s17, %s15
  $region1: #{forward.1} parent=0
    #allocation2 [shape = 'u8[8192]{0}', space=vmem, size = 0x2000, scoped, tag = 'input window, operand 0, single buffered']
    #allocation3 [shape = 's32[1]{0}', space=sflag, size = 0x4, scoped, tag = 'scoped memory for forward.1']
    #allocation4 [shape = 's32[1]{0}', space=sflag, size = 0x4, scoped, tag = 'scoped memory for forward.1']
    #allocation5 [shape = 'u8[131072]{0}', space=vmem, size = 0x20000, scoped, tag = 'input window, operand 2, single buffered']
    #allocation6 [shape = 's32[1]{0}', space=sflag, size = 0x4, scoped, tag = 'scoped memory for forward.1']
    #allocation7 [shape = 'u8[131072]{0}', space=vmem, size = 0x20000, scoped, tag = 'input window, operand 3, single buffered']
    #allocation8 [shape = 'u8[65536]{0}', space=vmem, size = 0x10000, scoped, tag = 'input window, operand 4, single buffered']
    #allocation9 [shape = 's32[1]{0}', space=sflag, size = 0x4, scoped, tag = 'scoped memory for forward.1']
    #allocation10 [shape = 'u8[65536]{0}', space=vmem, size = 0x10000, scoped, tag = 'input window, operand 7, single buffered']
    #allocation11 [shape = 'u8[131072]{0}', space=vmem, size = 0x20000, scoped, tag = 'input window, operand 8, single buffered']
    #allocation12 [shape = 's32[1]{0}', space=sflag, size = 0x4, scoped, tag = 'scoped memory for forward.1']
    #allocation13 [shape = 'u8[131072]{0}', space=vmem, size = 0x20000, scoped, tag = 'input window, operand 9, single buffered']
    #allocation14 [shape = 'u8[65536]{0}', space=vmem, size = 0x10000, scoped, tag = 'input window, operand 10, single buffered']
    #allocation15 [shape = 's32[1]{0}', space=sflag, size = 0x4, scoped, tag = 'scoped memory for forward.1']
    #allocation16 [shape = 'u8[8192]{0}', space=vmem, size = 0x2000, scoped, tag = 'output window, operand 1, single buffered']
    %19 = vsyncpa [#allocation3], 0
    %20 = vsyncpa [#allocation6], 0
    %21 = vsyncpa [#allocation9], 0
    %22 = vsyncpa [#allocation12], 0
    %23 = vsyncpa [#allocation15], 0
    %24 = vsyncpa [#allocation4], 0
    // Predicated region
    $region2: #{forward.1} parent=1 // pred_check
      _
    $region3: #{forward.1} parent=1 // pred_check_branch
      %26 = sbr.rel (0) target = $region5
    $region4: #{forward.1} parent=1 // pred_region
      %28 = vsyncadd [#allocation3], 0
      %s29 = sshll.u32 %s0, 4
      %s30 = int_to_ptr.hbm [resolvable:$true] %s29
      %s31 = sshll.u32 [#allocation2], 4
      %s32 = int_to_ptr.vmem [resolvable:$true] %s31
      %37 = dma.hbm_to_vmem [thread:$0]  %s30, 256, %s32, [#allocation3], 128, 128, 8
    $region5: #{forward.1} parent=1 // pred_fallthru
      _
    // Predicated region
    $region6: #{forward.1} parent=1 // pred_check
      _
    $region7: #{forward.1} parent=1 // pred_check_branch
      %39 = sbr.rel (0) target = $region9
    $region8: #{forward.1} parent=1 // pred_region
      _
    $region9: #{forward.1} parent=1 // pred_fallthru
      _
    // Predicated region
    $region10: #{forward.1} parent=1 // pred_check
      _
    $region11: #{forward.1} parent=1 // pred_check_branch
      %41 = sbr.rel (0) target = $region13
    $region12: #{forward.1} parent=1 // pred_region
      %43 = vsyncadd [#allocation6], 0
      %s44 = sshll.u32 %s2, 4
      %s45 = int_to_ptr.hbm [resolvable:$true] %s44
      %s46 = sshll.u32 [#allocation5], 4
      %s47 = int_to_ptr.vmem [resolvable:$true] %s46
      %52 = dma.hbm_to_vmem [thread:$0]  %s45, 4096, %s47, [#allocation6], 128, 128, 8
    $region13: #{forward.1} parent=1 // pred_fallthru
      _
    // Predicated region
    $region14: #{forward.1} parent=1 // pred_check
      _
    $region15: #{forward.1} parent=1 // pred_check_branch
      %54 = sbr.rel (0) target = $region17
    $region16: #{forward.1} parent=1 // pred_region
      %56 = vsyncadd [#allocation6], 0
      %s57 = sshll.u32 %s3, 4
      %s58 = int_to_ptr.hbm [resolvable:$true] %s57
      %s59 = sshll.u32 [#allocation7], 4
      %s60 = int_to_ptr.vmem [resolvable:$true] %s59
      %65 = dma.hbm_to_vmem [thread:$0]  %s58, 4096, %s60, [#allocation6], 128, 128, 8
    $region17: #{forward.1} parent=1 // pred_fallthru
      _
    // Predicated region
    $region18: #{forward.1} parent=1 // pred_check
      _
    $region19: #{forward.1} parent=1 // pred_check_branch
      %67 = sbr.rel (0) target = $region21
    $region20: #{forward.1} parent=1 // pred_region
      %69 = vsyncadd [#allocation9], 0
      %s70 = sshll.u32 %s4, 4
      %s71 = int_to_ptr.hbm [resolvable:$true] %s70
      %s72 = sshll.u32 [#allocation8], 4
      %s73 = int_to_ptr.vmem [resolvable:$true] %s72
      %78 = dma.hbm_to_vmem [thread:$0]  %s71, 2048, %s73, [#allocation9], 64, 64, 4
    $region21: #{forward.1} parent=1 // pred_fallthru
      _
    // Predicated region
    $region22: #{forward.1} parent=1 // pred_check
      _
    $region23: #{forward.1} parent=1 // pred_check_branch
      %80 = sbr.rel (0) target = $region25
    $region24: #{forward.1} parent=1 // pred_region
      _
    $region25: #{forward.1} parent=1 // pred_fallthru
      _
    // Predicated region
    $region26: #{forward.1} parent=1 // pred_check
      _
    $region27: #{forward.1} parent=1 // pred_check_branch
      %82 = sbr.rel (0) target = $region29
    $region28: #{forward.1} parent=1 // pred_region
      _
    $region29: #{forward.1} parent=1 // pred_fallthru
      _
    // Predicated region
    $region30: #{forward.1} parent=1 // pred_check
      _
    $region31: #{forward.1} parent=1 // pred_check_branch
      %84 = sbr.rel (0) target = $region33
    $region32: #{forward.1} parent=1 // pred_region
      %86 = vsyncadd [#allocation9], 0
      %s87 = sshll.u32 %s7, 4
      %s88 = int_to_ptr.hbm [resolvable:$true] %s87
      %s89 = sshll.u32 [#allocation10], 4
      %s90 = int_to_ptr.vmem [resolvable:$true] %s89
      %95 = dma.hbm_to_vmem [thread:$0]  %s88, 2048, %s90, [#allocation9], 128, 128, 8
    $region33: #{forward.1} parent=1 // pred_fallthru
      _
    // Predicated region
    $region34: #{forward.1} parent=1 // pred_check
      _
    $region35: #{forward.1} parent=1 // pred_check_branch
      %97 = sbr.rel (0) target = $region37
    $region36: #{forward.1} parent=1 // pred_region
      %99 = vsyncadd [#allocation12], 0
      %s100 = sshll.u32 %s8, 4
      %s101 = int_to_ptr.hbm [resolvable:$true] %s100
      %s102 = sshll.u32 [#allocation11], 4
      %s103 = int_to_ptr.vmem [resolvable:$true] %s102
      %108 = dma.hbm_to_vmem [thread:$0]  %s101, 4096, %s103, [#allocation12], 128, 128, 8
    $region37: #{forward.1} parent=1 // pred_fallthru
      _
    // Predicated region
    $region38: #{forward.1} parent=1 // pred_check
      _
    $region39: #{forward.1} parent=1 // pred_check_branch
      %110 = sbr.rel (0) target = $region41
    $region40: #{forward.1} parent=1 // pred_region
      %112 = vsyncadd [#allocation12], 0
      %s113 = sshll.u32 %s9, 4
      %s114 = int_to_ptr.hbm [resolvable:$true] %s113
      %s115 = sshll.u32 [#allocation13], 4
      %s116 = int_to_ptr.vmem [resolvable:$true] %s115
      %121 = dma.hbm_to_vmem [thread:$0]  %s114, 4096, %s116, [#allocation12], 128, 128, 8
    $region41: #{forward.1} parent=1 // pred_fallthru
      _
    // Predicated region
    $region42: #{forward.1} parent=1 // pred_check
      _
    $region43: #{forward.1} parent=1 // pred_check_branch
      %123 = sbr.rel (0) target = $region45
    $region44: #{forward.1} parent=1 // pred_region
      %125 = vsyncadd [#allocation15], 0
      %s126 = sshll.u32 %s10, 4
      %s127 = int_to_ptr.hbm [resolvable:$true] %s126
      %s128 = sshll.u32 [#allocation14], 4
      %s129 = int_to_ptr.vmem [resolvable:$true] %s128
      %134 = dma.hbm_to_vmem [thread:$0]  %s127, 2048, %s129, [#allocation15], 64, 64, 4
    $region45: #{forward.1} parent=1 // pred_fallthru
      _
    // Predicated region
    $region46: #{forward.1} parent=1 // pred_check
      _
    $region47: #{forward.1} parent=1 // pred_check_branch
      %136 = sbr.rel (0) target = $region49
    $region48: #{forward.1} parent=1 // pred_region
      _
    $region49: #{forward.1} parent=1 // pred_fallthru
      _
    // Predicated region
    $region50: #{forward.1} parent=1 // pred_check
      _
    $region51: #{forward.1} parent=1 // pred_check_branch
      %138 = sbr.rel (0) target = $region53
    $region52: #{forward.1} parent=1 // pred_region
      %140 = dma.done [#allocation3], 256
    $region53: #{forward.1} parent=1 // pred_fallthru
      _
    // Predicated region
    $region54: #{forward.1} parent=1 // pred_check
      _
    $region55: #{forward.1} parent=1 // pred_check_branch
      %142 = sbr.rel (0) target = $region57
    $region56: #{forward.1} parent=1 // pred_region
      %144 = dma.done [#allocation6], 4096
    $region57: #{forward.1} parent=1 // pred_fallthru
      _
    // Predicated region
    $region58: #{forward.1} parent=1 // pred_check
      _
    $region59: #{forward.1} parent=1 // pred_check_branch
      %146 = sbr.rel (0) target = $region61
    $region60: #{forward.1} parent=1 // pred_region
      %148 = dma.done [#allocation6], 4096
    $region61: #{forward.1} parent=1 // pred_fallthru
      _
    // Predicated region
    $region62: #{forward.1} parent=1 // pred_check
      _
    $region63: #{forward.1} parent=1 // pred_check_branch
      %150 = sbr.rel (0) target = $region65
    $region64: #{forward.1} parent=1 // pred_region
      %152 = dma.done [#allocation9], 2048
    $region65: #{forward.1} parent=1 // pred_fallthru
      _
    // Predicated region
    $region66: #{forward.1} parent=1 // pred_check
      _
    $region67: #{forward.1} parent=1 // pred_check_branch
      %154 = sbr.rel (0) target = $region69
    $region68: #{forward.1} parent=1 // pred_region
      %156 = dma.done [#allocation9], 2048
    $region69: #{forward.1} parent=1 // pred_fallthru
      _
    // Predicated region
    $region70: #{forward.1} parent=1 // pred_check
      _
    $region71: #{forward.1} parent=1 // pred_check_branch
      %158 = sbr.rel (0) target = $region73
    $region72: #{forward.1} parent=1 // pred_region
      %160 = dma.done [#allocation12], 4096
    $region73: #{forward.1} parent=1 // pred_fallthru
      _
    // Predicated region
    $region74: #{forward.1} parent=1 // pred_check
      _
    $region75: #{forward.1} parent=1 // pred_check_branch
      %162 = sbr.rel (0) target = $region77
    $region76: #{forward.1} parent=1 // pred_region
      %164 = dma.done [#allocation12], 4096
    $region77: #{forward.1} parent=1 // pred_fallthru
      _
    // Predicated region
    $region78: #{forward.1} parent=1 // pred_check
      _
    $region79: #{forward.1} parent=1 // pred_check_branch
      %166 = sbr.rel (0) target = $region81
    $region80: #{forward.1} parent=1 // pred_region
      %168 = dma.done [#allocation15], 2048
    $region81: #{forward.1} parent=1 // pred_fallthru
      _
    %v170 = vld [vmem:[#allocation2] sm:$0xff]
    %v171 = vld [vmem:[#allocation2 + $0x8] sm:$0xff]
    %v172 = vld [vmem:[%s1] sm:$0xff]
    %v173 = vld [vmem:[%s1 + $0x8] sm:$0xff]
    %v174 = vld [vmem:[%s1 + $0x10] sm:$0xff]
    %v175 = vld [vmem:[%s1 + $0x18] sm:$0xff]
    %v176 = vld [vmem:[%s11] ss:$8 sm:$0x3]
    %v177 = vpack.c.bf16 %v171, %v170
    %v179 = vperm.slane %v176, 0
    %v180 = vperm.slane %v176, 1
    %v187 = vunpack.c.l.b16 %v172
    %v188 = vunpack.c.h.b16 %v172
    %v189 = vunpack.c.l.b16 %v173
    %v190 = vunpack.c.h.b16 %v173
    %v191 = vunpack.c.l.b16 %v174
    %v192 = vunpack.c.h.b16 %v174
    %v193 = vunpack.c.l.b16 %v175
    %v194 = vunpack.c.h.b16 %v175
    %v195 = vpack.c.b16 %v189, %v187
    %v196 = vpack.c.b16 %v190, %v188
    %v197 = vpack.c.b16 %v193, %v191
    %v198 = vpack.c.b16 %v194, %v192
    %vm203 = vcmask 261120
    %v205 = vsel %vm203, %v177, 0
    %207 = vmatpush.bf16.msra.mxu0 0
    %208 = vmatpush.bf16.msra.mxu0 0
    %209 = vmatpush.bf16.msra.mxu0 0
    %210 = vmatpush.bf16.msra.mxu0 0
    %211 = vmatpush.bf16.msra.mxu0 0
    %212 = vmatpush.bf16.msra.mxu0 0
    %213 = vmatpush.bf16.msra.mxu0 %v197
    %214 = vmatpush.bf16.msra.mxu0 %v195
    %215 = vmatmul.bf16.gmra.mxu0 %v205
    %v216 = vpop.f32.mrf.mxu0
    %v217 = vadd.f32 %v179, %v216
    %v218 = vpop.f32.mrf.mxu0
    %v219 = vadd.f32 %v179, %v218
    %220 = vdwg.mxu0
    %221 = vmatpush.bf16.msra.mxu0 0
    %222 = vmatpush.bf16.msra.mxu0 0
    %223 = vmatpush.bf16.msra.mxu0 0
    %224 = vmatpush.bf16.msra.mxu0 0
    %225 = vmatpush.bf16.msra.mxu0 0
    %226 = vmatpush.bf16.msra.mxu0 0
    %227 = vmatpush.bf16.msra.mxu0 %v198
    %228 = vmatpush.bf16.msra.mxu0 %v196
    %229 = vmatmul.bf16.gmra.mxu0 %v205
    %v230 = vpop.f32.mrf.mxu0
    %v231 = vadd.f32 %v180, %v230
    %v232 = vpop.f32.mrf.mxu0
    %v233 = vadd.f32 %v180, %v232
    %234 = vdwg.mxu0
    %v235 = vmax.f32 %v217, 0.0
    %v236 = vmax.f32 %v231, 0.0
    %v237 = vmax.f32 %v219, 0.0
    %v238 = vmax.f32 %v233, 0.0
    %v239 = vld [vmem:[#allocation5] sm:$0xff]
    %v240 = vld [vmem:[#allocation5 + $0x8] sm:$0xff]
    %v241 = vld [vmem:[#allocation5 + $0x10] sm:$0xff]
    %v242 = vld [vmem:[#allocation5 + $0x18] sm:$0xff]
    %v243 = vld [vmem:[#allocation5 + $0x20] sm:$0xff]
    %v244 = vld [vmem:[#allocation5 + $0x28] sm:$0xff]
    %v245 = vld [vmem:[#allocation5 + $0x30] sm:$0xff]
    %v246 = vld [vmem:[#allocation5 + $0x38] sm:$0xff]
    %v247 = vld [vmem:[#allocation5 + $0x40] sm:$0xff]
    %v248 = vld [vmem:[#allocation5 + $0x48] sm:$0xff]
    %v249 = vld [vmem:[#allocation5 + $0x50] sm:$0xff]
    %v250 = vld [vmem:[#allocation5 + $0x58] sm:$0xff]
    %v251 = vld [vmem:[#allocation5 + $0x60] sm:$0xff]
    %v252 = vld [vmem:[#allocation5 + $0x68] sm:$0xff]
    %v253 = vld [vmem:[#allocation5 + $0x70] sm:$0xff]
    %v254 = vld [vmem:[#allocation5 + $0x78] sm:$0xff]
    %v255 = vld [vmem:[#allocation5 + $0x80] sm:$0xff]
    %v256 = vld [vmem:[#allocation5 + $0x88] sm:$0xff]
    %v257 = vld [vmem:[#allocation5 + $0x90] sm:$0xff]
    %v258 = vld [vmem:[#allocation5 + $0x98] sm:$0xff]
    %v259 = vld [vmem:[#allocation5 + $0xa0] sm:$0xff]
    %v260 = vld [vmem:[#allocation5 + $0xa8] sm:$0xff]
    %v261 = vld [vmem:[#allocation5 + $0xb0] sm:$0xff]
    %v262 = vld [vmem:[#allocation5 + $0xb8] sm:$0xff]
    %v263 = vld [vmem:[#allocation5 + $0xc0] sm:$0xff]
    %v264 = vld [vmem:[#allocation5 + $0xc8] sm:$0xff]
    %v265 = vld [vmem:[#allocation5 + $0xd0] sm:$0xff]
    %v266 = vld [vmem:[#allocation5 + $0xd8] sm:$0xff]
    %v267 = vld [vmem:[#allocation5 + $0xe0] sm:$0xff]
    %v268 = vld [vmem:[#allocation5 + $0xe8] sm:$0xff]
    %v269 = vld [vmem:[#allocation5 + $0xf0] sm:$0xff]
    %v270 = vld [vmem:[#allocation5 + $0xf8] sm:$0xff]
    %s271 = scalar_lea.vmem %s11, 1
    %v272 = vld [vmem:[%s271] ss:$8 sm:$0x3]
    %v273 = vpack.c.bf16 %v237, %v235
    %v274 = vpack.c.bf16 %v238, %v236
    %v276 = vperm.slane %v272, 0
    %v277 = vperm.slane %v272, 1
    %v312 = vunpack.c.l.b16 %v239
    %v313 = vunpack.c.h.b16 %v239
    %v314 = vunpack.c.l.b16 %v240
    %v315 = vunpack.c.h.b16 %v240
    %v316 = vunpack.c.l.b16 %v241
    %v317 = vunpack.c.h.b16 %v241
    %v318 = vunpack.c.l.b16 %v242
    %v319 = vunpack.c.h.b16 %v242
    %v320 = vunpack.c.l.b16 %v243
    %v321 = vunpack.c.h.b16 %v243
    %v322 = vunpack.c.l.b16 %v244
    %v323 = vunpack.c.h.b16 %v244
    %v324 = vunpack.c.l.b16 %v245
    %v325 = vunpack.c.h.b16 %v245
    %v326 = vunpack.c.l.b16 %v246
    %v327 = vunpack.c.h.b16 %v246
    %v328 = vunpack.c.l.b16 %v247
    %v329 = vunpack.c.h.b16 %v247
    %v330 = vunpack.c.l.b16 %v248
    %v331 = vunpack.c.h.b16 %v248
    %v332 = vunpack.c.l.b16 %v249
    %v333 = vunpack.c.h.b16 %v249
    %v334 = vunpack.c.l.b16 %v250
    %v335 = vunpack.c.h.b16 %v250
    %v336 = vunpack.c.l.b16 %v251
    %v337 = vunpack.c.h.b16 %v251
    %v338 = vunpack.c.l.b16 %v252
    %v339 = vunpack.c.h.b16 %v252
    %v340 = vunpack.c.l.b16 %v253
    %v341 = vunpack.c.h.b16 %v253
    %v342 = vunpack.c.l.b16 %v254
    %v343 = vunpack.c.h.b16 %v254
    %v344 = vunpack.c.l.b16 %v255
    %v345 = vunpack.c.h.b16 %v255
    %v346 = vunpack.c.l.b16 %v256
    %v347 = vunpack.c.h.b16 %v256
    %v348 = vunpack.c.l.b16 %v257
    %v349 = vunpack.c.h.b16 %v257
    %v350 = vunpack.c.l.b16 %v258
    %v351 = vunpack.c.h.b16 %v258
    %v352 = vunpack.c.l.b16 %v259
    %v353 = vunpack.c.h.b16 %v259
    %v354 = vunpack.c.l.b16 %v260
    %v355 = vunpack.c.h.b16 %v260
    %v356 = vunpack.c.l.b16 %v261
    %v357 = vunpack.c.h.b16 %v261
    %v358 = vunpack.c.l.b16 %v262
    %v359 = vunpack.c.h.b16 %v262
    %v360 = vunpack.c.l.b16 %v263
    %v361 = vunpack.c.h.b16 %v263
    %v362 = vunpack.c.l.b16 %v264
    %v363 = vunpack.c.h.b16 %v264
    %v364 = vunpack.c.l.b16 %v265
    %v365 = vunpack.c.h.b16 %v265
    %v366 = vunpack.c.l.b16 %v266
    %v367 = vunpack.c.h.b16 %v266
    %v368 = vunpack.c.l.b16 %v267
    %v369 = vunpack.c.h.b16 %v267
    %v370 = vunpack.c.l.b16 %v268
    %v371 = vunpack.c.h.b16 %v268
    %v372 = vunpack.c.l.b16 %v269
    %v373 = vunpack.c.h.b16 %v269
    %v374 = vunpack.c.l.b16 %v270
    %v375 = vunpack.c.h.b16 %v270
    %v376 = vpack.c.b16 %v314, %v312
    %v377 = vpack.c.b16 %v315, %v313
    %v378 = vpack.c.b16 %v318, %v316
    %v379 = vpack.c.b16 %v319, %v317
    %v380 = vpack.c.b16 %v322, %v320
    %v381 = vpack.c.b16 %v323, %v321
    %v382 = vpack.c.b16 %v326, %v324
    %v383 = vpack.c.b16 %v327, %v325
    %v384 = vpack.c.b16 %v330, %v328
    %v385 = vpack.c.b16 %v331, %v329
    %v386 = vpack.c.b16 %v334, %v332
    %v387 = vpack.c.b16 %v335, %v333
    %v388 = vpack.c.b16 %v338, %v336
    %v389 = vpack.c.b16 %v339, %v337
    %v390 = vpack.c.b16 %v342, %v340
    %v391 = vpack.c.b16 %v343, %v341
    %v392 = vpack.c.b16 %v346, %v344
    %v393 = vpack.c.b16 %v347, %v345
    %v394 = vpack.c.b16 %v350, %v348
    %v395 = vpack.c.b16 %v351, %v349
    %v396 = vpack.c.b16 %v354, %v352
    %v397 = vpack.c.b16 %v355, %v353
    %v398 = vpack.c.b16 %v358, %v356
    %v399 = vpack.c.b16 %v359, %v357
    %v400 = vpack.c.b16 %v362, %v360
    %v401 = vpack.c.b16 %v363, %v361
    %v402 = vpack.c.b16 %v366, %v364
    %v403 = vpack.c.b16 %v367, %v365
    %v404 = vpack.c.b16 %v370, %v368
    %v405 = vpack.c.b16 %v371, %v369
    %v406 = vpack.c.b16 %v374, %v372
    %v407 = vpack.c.b16 %v375, %v373
    %440 = vmatpush.bf16.msra.mxu0 %v390
    %441 = vmatpush.bf16.msra.mxu0 %v388
    %442 = vmatpush.bf16.msra.mxu0 %v386
    %443 = vmatpush.bf16.msra.mxu0 %v384
    %444 = vmatpush.bf16.msra.mxu0 %v382
    %445 = vmatpush.bf16.msra.mxu0 %v380
    %446 = vmatpush.bf16.msra.mxu0 %v378
    %447 = vmatpush.bf16.msra.mxu0 %v376
    %448 = vmatmul.bf16.gmra.mxu0 %v273
    %v449 = vpop.f32.mrf.mxu0
    %v450 = vadd.f32 %v276, %v449
    %v451 = vpop.f32.mrf.mxu0
    %v452 = vadd.f32 %v276, %v451
    %453 = vdwg.mxu0
    %454 = vmatpush.bf16.msra.mxu0 %v406
    %455 = vmatpush.bf16.msra.mxu0 %v404
    %456 = vmatpush.bf16.msra.mxu0 %v402
    %457 = vmatpush.bf16.msra.mxu0 %v400
    %458 = vmatpush.bf16.msra.mxu0 %v398
    %459 = vmatpush.bf16.msra.mxu0 %v396
    %460 = vmatpush.bf16.msra.mxu0 %v394
    %461 = vmatpush.bf16.msra.mxu0 %v392
    %462 = vmatmul.bf16.gmra.mxu0 %v274
    %v463 = vpop.f32.mrf.mxu0
    %v464 = vadd.f32 %v450, %v463
    %v465 = vpop.f32.mrf.mxu0
    %v466 = vadd.f32 %v452, %v465
    %467 = vdwg.mxu0
    %468 = vmatpush.bf16.msra.mxu0 %v391
    %469 = vmatpush.bf16.msra.mxu0 %v389
    %470 = vmatpush.bf16.msra.mxu0 %v387
    %471 = vmatpush.bf16.msra.mxu0 %v385
    %472 = vmatpush.bf16.msra.mxu0 %v383
    %473 = vmatpush.bf16.msra.mxu0 %v381
    %474 = vmatpush.bf16.msra.mxu0 %v379
    %475 = vmatpush.bf16.msra.mxu0 %v377
    %476 = vmatmul.bf16.gmra.mxu0 %v273
    %v477 = vpop.f32.mrf.mxu0
    %v478 = vadd.f32 %v277, %v477
    %v479 = vpop.f32.mrf.mxu0
    %v480 = vadd.f32 %v277, %v479
    %481 = vdwg.mxu0
    %482 = vmatpush.bf16.msra.mxu0 %v407
    %483 = vmatpush.bf16.msra.mxu0 %v405
    %484 = vmatpush.bf16.msra.mxu0 %v403
    %485 = vmatpush.bf16.msra.mxu0 %v401
    %486 = vmatpush.bf16.msra.mxu0 %v399
    %487 = vmatpush.bf16.msra.mxu0 %v397
    %488 = vmatpush.bf16.msra.mxu0 %v395
    %489 = vmatpush.bf16.msra.mxu0 %v393
    %490 = vmatmul.bf16.gmra.mxu0 %v274
    %v491 = vpop.f32.mrf.mxu0
    %v492 = vadd.f32 %v478, %v491
    %v493 = vpop.f32.mrf.mxu0
    %v494 = vadd.f32 %v480, %v493
    %495 = vdwg.mxu0
    %v496 = vmax.f32 %v464, 0.0
    %v497 = vmax.f32 %v492, 0.0
    %v498 = vmax.f32 %v466, 0.0
    %v499 = vmax.f32 %v494, 0.0
    %v500 = vld [vmem:[#allocation7] sm:$0xff]
    %v501 = vld [vmem:[#allocation7 + $0x8] sm:$0xff]
    %v502 = vld [vmem:[#allocation7 + $0x10] sm:$0xff]
    %v503 = vld [vmem:[#allocation7 + $0x18] sm:$0xff]
    %v504 = vld [vmem:[#allocation7 + $0x20] sm:$0xff]
    %v505 = vld [vmem:[#allocation7 + $0x28] sm:$0xff]
    %v506 = vld [vmem:[#allocation7 + $0x30] sm:$0xff]
    %v507 = vld [vmem:[#allocation7 + $0x38] sm:$0xff]
    %v508 = vld [vmem:[#allocation7 + $0x40] sm:$0xff]
    %v509 = vld [vmem:[#allocation7 + $0x48] sm:$0xff]
    %v510 = vld [vmem:[#allocation7 + $0x50] sm:$0xff]
    %v511 = vld [vmem:[#allocation7 + $0x58] sm:$0xff]
    %v512 = vld [vmem:[#allocation7 + $0x60] sm:$0xff]
    %v513 = vld [vmem:[#allocation7 + $0x68] sm:$0xff]
    %v514 = vld [vmem:[#allocation7 + $0x70] sm:$0xff]
    %v515 = vld [vmem:[#allocation7 + $0x78] sm:$0xff]
    %v516 = vld [vmem:[#allocation7 + $0x80] sm:$0xff]
    %v517 = vld [vmem:[#allocation7 + $0x88] sm:$0xff]
    %v518 = vld [vmem:[#allocation7 + $0x90] sm:$0xff]
    %v519 = vld [vmem:[#allocation7 + $0x98] sm:$0xff]
    %v520 = vld [vmem:[#allocation7 + $0xa0] sm:$0xff]
    %v521 = vld [vmem:[#allocation7 + $0xa8] sm:$0xff]
    %v522 = vld [vmem:[#allocation7 + $0xb0] sm:$0xff]
    %v523 = vld [vmem:[#allocation7 + $0xb8] sm:$0xff]
    %v524 = vld [vmem:[#allocation7 + $0xc0] sm:$0xff]
    %v525 = vld [vmem:[#allocation7 + $0xc8] sm:$0xff]
    %v526 = vld [vmem:[#allocation7 + $0xd0] sm:$0xff]
    %v527 = vld [vmem:[#allocation7 + $0xd8] sm:$0xff]
    %v528 = vld [vmem:[#allocation7 + $0xe0] sm:$0xff]
    %v529 = vld [vmem:[#allocation7 + $0xe8] sm:$0xff]
    %v530 = vld [vmem:[#allocation7 + $0xf0] sm:$0xff]
    %v531 = vld [vmem:[#allocation7 + $0xf8] sm:$0xff]
    %s532 = scalar_lea.vmem %s11, 2
    %v533 = vld [vmem:[%s532] ss:$8 sm:$0x3]
    %v534 = vpack.c.bf16 %v498, %v496
    %v535 = vpack.c.bf16 %v499, %v497
    %v537 = vperm.slane %v533, 0
    %v538 = vperm.slane %v533, 1
    %v573 = vunpack.c.l.b16 %v500
    %v574 = vunpack.c.h.b16 %v500
    %v575 = vunpack.c.l.b16 %v501
    %v576 = vunpack.c.h.b16 %v501
    %v577 = vunpack.c.l.b16 %v502
    %v578 = vunpack.c.h.b16 %v502
    %v579 = vunpack.c.l.b16 %v503
    %v580 = vunpack.c.h.b16 %v503
    %v581 = vunpack.c.l.b16 %v504
    %v582 = vunpack.c.h.b16 %v504
    %v583 = vunpack.c.l.b16 %v505
    %v584 = vunpack.c.h.b16 %v505
    %v585 = vunpack.c.l.b16 %v506
    %v586 = vunpack.c.h.b16 %v506
    %v587 = vunpack.c.l.b16 %v507
    %v588 = vunpack.c.h.b16 %v507
    %v589 = vunpack.c.l.b16 %v508
    %v590 = vunpack.c.h.b16 %v508
    %v591 = vunpack.c.l.b16 %v509
    %v592 = vunpack.c.h.b16 %v509
    %v593 = vunpack.c.l.b16 %v510
    %v594 = vunpack.c.h.b16 %v510
    %v595 = vunpack.c.l.b16 %v511
    %v596 = vunpack.c.h.b16 %v511
    %v597 = vunpack.c.l.b16 %v512
    %v598 = vunpack.c.h.b16 %v512
    %v599 = vunpack.c.l.b16 %v513
    %v600 = vunpack.c.h.b16 %v513
    %v601 = vunpack.c.l.b16 %v514
    %v602 = vunpack.c.h.b16 %v514
    %v603 = vunpack.c.l.b16 %v515
    %v604 = vunpack.c.h.b16 %v515
    %v605 = vunpack.c.l.b16 %v516
    %v606 = vunpack.c.h.b16 %v516
    %v607 = vunpack.c.l.b16 %v517
    %v608 = vunpack.c.h.b16 %v517
    %v609 = vunpack.c.l.b16 %v518
    %v610 = vunpack.c.h.b16 %v518
    %v611 = vunpack.c.l.b16 %v519
    %v612 = vunpack.c.h.b16 %v519
    %v613 = vunpack.c.l.b16 %v520
    %v614 = vunpack.c.h.b16 %v520
    %v615 = vunpack.c.l.b16 %v521
    %v616 = vunpack.c.h.b16 %v521
    %v617 = vunpack.c.l.b16 %v522
    %v618 = vunpack.c.h.b16 %v522
    %v619 = vunpack.c.l.b16 %v523
    %v620 = vunpack.c.h.b16 %v523
    %v621 = vunpack.c.l.b16 %v524
    %v622 = vunpack.c.h.b16 %v524
    %v623 = vunpack.c.l.b16 %v525
    %v624 = vunpack.c.h.b16 %v525
    %v625 = vunpack.c.l.b16 %v526
    %v626 = vunpack.c.h.b16 %v526
    %v627 = vunpack.c.l.b16 %v527
    %v628 = vunpack.c.h.b16 %v527
    %v629 = vunpack.c.l.b16 %v528
    %v630 = vunpack.c.h.b16 %v528
    %v631 = vunpack.c.l.b16 %v529
    %v632 = vunpack.c.h.b16 %v529
    %v633 = vunpack.c.l.b16 %v530
    %v634 = vunpack.c.h.b16 %v530
    %v635 = vunpack.c.l.b16 %v531
    %v636 = vunpack.c.h.b16 %v531
    %v637 = vpack.c.b16 %v575, %v573
    %v638 = vpack.c.b16 %v576, %v574
    %v639 = vpack.c.b16 %v579, %v577
    %v640 = vpack.c.b16 %v580, %v578
    %v641 = vpack.c.b16 %v583, %v581
    %v642 = vpack.c.b16 %v584, %v582
    %v643 = vpack.c.b16 %v587, %v585
    %v644 = vpack.c.b16 %v588, %v586
    %v645 = vpack.c.b16 %v591, %v589
    %v646 = vpack.c.b16 %v592, %v590
    %v647 = vpack.c.b16 %v595, %v593
    %v648 = vpack.c.b16 %v596, %v594
    %v649 = vpack.c.b16 %v599, %v597
    %v650 = vpack.c.b16 %v600, %v598
    %v651 = vpack.c.b16 %v603, %v601
    %v652 = vpack.c.b16 %v604, %v602
    %v653 = vpack.c.b16 %v607, %v605
    %v654 = vpack.c.b16 %v608, %v606
    %v655 = vpack.c.b16 %v611, %v609
    %v656 = vpack.c.b16 %v612, %v610
    %v657 = vpack.c.b16 %v615, %v613
    %v658 = vpack.c.b16 %v616, %v614
    %v659 = vpack.c.b16 %v619, %v617
    %v660 = vpack.c.b16 %v620, %v618
    %v661 = vpack.c.b16 %v623, %v621
    %v662 = vpack.c.b16 %v624, %v622
    %v663 = vpack.c.b16 %v627, %v625
    %v664 = vpack.c.b16 %v628, %v626
    %v665 = vpack.c.b16 %v631, %v629
    %v666 = vpack.c.b16 %v632, %v630
    %v667 = vpack.c.b16 %v635, %v633
    %v668 = vpack.c.b16 %v636, %v634
    %701 = vmatpush.bf16.msra.mxu0 %v651
    %702 = vmatpush.bf16.msra.mxu0 %v649
    %703 = vmatpush.bf16.msra.mxu0 %v647
    %704 = vmatpush.bf16.msra.mxu0 %v645
    %705 = vmatpush.bf16.msra.mxu0 %v643
    %706 = vmatpush.bf16.msra.mxu0 %v641
    %707 = vmatpush.bf16.msra.mxu0 %v639
    %708 = vmatpush.bf16.msra.mxu0 %v637
    %709 = vmatmul.bf16.gmra.mxu0 %v534
    %v710 = vpop.f32.mrf.mxu0
    %v711 = vadd.f32 %v537, %v710
    %v712 = vpop.f32.mrf.mxu0
    %v713 = vadd.f32 %v537, %v712
    %714 = vdwg.mxu0
    %715 = vmatpush.bf16.msra.mxu0 %v667
    %716 = vmatpush.bf16.msra.mxu0 %v665
    %717 = vmatpush.bf16.msra.mxu0 %v663
    %718 = vmatpush.bf16.msra.mxu0 %v661
    %719 = vmatpush.bf16.msra.mxu0 %v659
    %720 = vmatpush.bf16.msra.mxu0 %v657
    %721 = vmatpush.bf16.msra.mxu0 %v655
    %722 = vmatpush.bf16.msra.mxu0 %v653
    %723 = vmatmul.bf16.gmra.mxu0 %v535
    %v724 = vpop.f32.mrf.mxu0
    %v725 = vadd.f32 %v711, %v724
    %v726 = vpop.f32.mrf.mxu0
    %v727 = vadd.f32 %v713, %v726
    %728 = vdwg.mxu0
    %729 = vmatpush.bf16.msra.mxu0 %v652
    %730 = vmatpush.bf16.msra.mxu0 %v650
    %731 = vmatpush.bf16.msra.mxu0 %v648
    %732 = vmatpush.bf16.msra.mxu0 %v646
    %733 = vmatpush.bf16.msra.mxu0 %v644
    %734 = vmatpush.bf16.msra.mxu0 %v642
    %735 = vmatpush.bf16.msra.mxu0 %v640
    %736 = vmatpush.bf16.msra.mxu0 %v638
    %737 = vmatmul.bf16.gmra.mxu0 %v534
    %v738 = vpop.f32.mrf.mxu0
    %v739 = vadd.f32 %v538, %v738
    %v740 = vpop.f32.mrf.mxu0
    %v741 = vadd.f32 %v538, %v740
    %742 = vdwg.mxu0
    %743 = vmatpush.bf16.msra.mxu0 %v668
    %744 = vmatpush.bf16.msra.mxu0 %v666
    %745 = vmatpush.bf16.msra.mxu0 %v664
    %746 = vmatpush.bf16.msra.mxu0 %v662
    %747 = vmatpush.bf16.msra.mxu0 %v660
    %748 = vmatpush.bf16.msra.mxu0 %v658
    %749 = vmatpush.bf16.msra.mxu0 %v656
    %750 = vmatpush.bf16.msra.mxu0 %v654
    %751 = vmatmul.bf16.gmra.mxu0 %v535
    %v752 = vpop.f32.mrf.mxu0
    %v753 = vadd.f32 %v739, %v752
    %v754 = vpop.f32.mrf.mxu0
    %v755 = vadd.f32 %v741, %v754
    %756 = vdwg.mxu0
    %v757 = vmax.f32 %v725, 0.0
    %v758 = vmax.f32 %v753, 0.0
    %v759 = vmax.f32 %v727, 0.0
    %v760 = vmax.f32 %v755, 0.0
    %v761 = vld [vmem:[#allocation8] sm:$0xf]
    %v762 = vld [vmem:[#allocation8 + $0x4] sm:$0xf]
    %v763 = vld [vmem:[#allocation8 + $0x8] sm:$0xf]
    %v764 = vld [vmem:[#allocation8 + $0xc] sm:$0xf]
    %v765 = vld [vmem:[#allocation8 + $0x10] sm:$0xf]
    %v766 = vld [vmem:[#allocation8 + $0x14] sm:$0xf]
    %v767 = vld [vmem:[#allocation8 + $0x18] sm:$0xf]
    %v768 = vld [vmem:[#allocation8 + $0x1c] sm:$0xf]
    %v769 = vld [vmem:[#allocation8 + $0x20] sm:$0xf]
    %v770 = vld [vmem:[#allocation8 + $0x24] sm:$0xf]
    %v771 = vld [vmem:[#allocation8 + $0x28] sm:$0xf]
    %v772 = vld [vmem:[#allocation8 + $0x2c] sm:$0xf]
    %v773 = vld [vmem:[#allocation8 + $0x30] sm:$0xf]
    %v774 = vld [vmem:[#allocation8 + $0x34] sm:$0xf]
    %v775 = vld [vmem:[#allocation8 + $0x38] sm:$0xf]
    %v776 = vld [vmem:[#allocation8 + $0x3c] sm:$0xf]
    %v777 = vld [vmem:[#allocation8 + $0x40] sm:$0xf]
    %v778 = vld [vmem:[#allocation8 + $0x44] sm:$0xf]
    %v779 = vld [vmem:[#allocation8 + $0x48] sm:$0xf]
    %v780 = vld [vmem:[#allocation8 + $0x4c] sm:$0xf]
    %v781 = vld [vmem:[#allocation8 + $0x50] sm:$0xf]
    %v782 = vld [vmem:[#allocation8 + $0x54] sm:$0xf]
    %v783 = vld [vmem:[#allocation8 + $0x58] sm:$0xf]
    %v784 = vld [vmem:[#allocation8 + $0x5c] sm:$0xf]
    %v785 = vld [vmem:[#allocation8 + $0x60] sm:$0xf]
    %v786 = vld [vmem:[#allocation8 + $0x64] sm:$0xf]
    %v787 = vld [vmem:[#allocation8 + $0x68] sm:$0xf]
    %v788 = vld [vmem:[#allocation8 + $0x6c] sm:$0xf]
    %v789 = vld [vmem:[#allocation8 + $0x70] sm:$0xf]
    %v790 = vld [vmem:[#allocation8 + $0x74] sm:$0xf]
    %v791 = vld [vmem:[#allocation8 + $0x78] sm:$0xf]
    %v792 = vld [vmem:[#allocation8 + $0x7c] sm:$0xf]
    %v793 = vld [vmem:[%s11 + $0x3] ss:$0 sm:$0xff]
    %v794 = vpack.c.bf16 %v759, %v757
    %v795 = vpack.c.bf16 %v760, %v758
    %v828 = vunpack.c.l.b16 %v761
    %v829 = vunpack.c.l.b16 %v762
    %v830 = vunpack.c.l.b16 %v763
    %v831 = vunpack.c.l.b16 %v764
    %v832 = vunpack.c.l.b16 %v765
    %v833 = vunpack.c.l.b16 %v766
    %v834 = vunpack.c.l.b16 %v767
    %v835 = vunpack.c.l.b16 %v768
    %v836 = vunpack.c.l.b16 %v769
    %v837 = vunpack.c.l.b16 %v770
    %v838 = vunpack.c.l.b16 %v771
    %v839 = vunpack.c.l.b16 %v772
    %v840 = vunpack.c.l.b16 %v773
    %v841 = vunpack.c.l.b16 %v774
    %v842 = vunpack.c.l.b16 %v775
    %v843 = vunpack.c.l.b16 %v776
    %v844 = vunpack.c.l.b16 %v777
    %v845 = vunpack.c.l.b16 %v778
    %v846 = vunpack.c.l.b16 %v779
    %v847 = vunpack.c.l.b16 %v780
    %v848 = vunpack.c.l.b16 %v781
    %v849 = vunpack.c.l.b16 %v782
    %v850 = vunpack.c.l.b16 %v783
    %v851 = vunpack.c.l.b16 %v784
    %v852 = vunpack.c.l.b16 %v785
    %v853 = vunpack.c.l.b16 %v786
    %v854 = vunpack.c.l.b16 %v787
    %v855 = vunpack.c.l.b16 %v788
    %v856 = vunpack.c.l.b16 %v789
    %v857 = vunpack.c.l.b16 %v790
    %v858 = vunpack.c.l.b16 %v791
    %v859 = vunpack.c.l.b16 %v792
    %v860 = vpack.c.b16 %v829, %v828
    %v861 = vpack.c.b16 %v831, %v830
    %v862 = vpack.c.b16 %v833, %v832
    %v863 = vpack.c.b16 %v835, %v834
    %v864 = vpack.c.b16 %v837, %v836
    %v865 = vpack.c.b16 %v839, %v838
    %v866 = vpack.c.b16 %v841, %v840
    %v867 = vpack.c.b16 %v843, %v842
    %v868 = vpack.c.b16 %v845, %v844
    %v869 = vpack.c.b16 %v847, %v846
    %v870 = vpack.c.b16 %v849, %v848
    %v871 = vpack.c.b16 %v851, %v850
    %v872 = vpack.c.b16 %v853, %v852
    %v873 = vpack.c.b16 %v855, %v854
    %v874 = vpack.c.b16 %v857, %v856
    %v875 = vpack.c.b16 %v859, %v858
    %892 = vmatpush.bf16.msra.mxu0 %v867
    %893 = vmatpush.bf16.msra.mxu0 %v866
    %894 = vmatpush.bf16.msra.mxu0 %v865
    %895 = vmatpush.bf16.msra.mxu0 %v864
    %896 = vmatpush.bf16.msra.mxu0 %v863
    %897 = vmatpush.bf16.msra.mxu0 %v862
    %898 = vmatpush.bf16.msra.mxu0 %v861
    %899 = vmatpush.bf16.msra.mxu0 %v860
    %900 = vmatmul.bf16.gmra.mxu0 %v794
    %v901 = vpop.f32.mrf.mxu0
    %v902 = vadd.f32 %v793, %v901
    %v903 = vpop.f32.mrf.mxu0
    %v904 = vadd.f32 %v793, %v903
    %905 = vdwg.mxu0
    %906 = vmatpush.bf16.msra.mxu0 %v875
    %907 = vmatpush.bf16.msra.mxu0 %v874
    %908 = vmatpush.bf16.msra.mxu0 %v873
    %909 = vmatpush.bf16.msra.mxu0 %v872
    %910 = vmatpush.bf16.msra.mxu0 %v871
    %911 = vmatpush.bf16.msra.mxu0 %v870
    %912 = vmatpush.bf16.msra.mxu0 %v869
    %913 = vmatpush.bf16.msra.mxu0 %v868
    %914 = vmatmul.bf16.gmra.mxu0 %v795
    %v915 = vpop.f32.mrf.mxu0
    %v916 = vadd.f32 %v902, %v915
    %v917 = vpop.f32.mrf.mxu0
    %v918 = vadd.f32 %v904, %v917
    %919 = vdwg.mxu0
    %v920 = vmax.f32 %v916, 0.0
    %v921 = vmax.f32 %v918, 0.0
    %v922 = vld [vmem:[%s5] sm:$0xf]
    %v923 = vld [vmem:[%s5 + $0x4] sm:$0xf]
    %v924 = vld [vmem:[%s5 + $0x8] sm:$0xf]
    %v925 = vld [vmem:[%s5 + $0xc] sm:$0xf]
    %v926 = vld [vmem:[%s5 + $0x10] sm:$0xf]
    %v927 = vld [vmem:[%s5 + $0x14] sm:$0xf]
    %v928 = vld [vmem:[%s5 + $0x18] sm:$0xf]
    %v929 = vld [vmem:[%s5 + $0x1c] sm:$0xf]
    %v930 = vld [vmem:[%s5 + $0x20] sm:$0xf]
    %v931 = vld [vmem:[%s5 + $0x24] sm:$0xf]
    %v932 = vld [vmem:[%s5 + $0x28] sm:$0xf]
    %v933 = vld [vmem:[%s5 + $0x2c] sm:$0xf]
    %v934 = vld [vmem:[%s5 + $0x30] sm:$0xf]
    %v935 = vld [vmem:[%s5 + $0x34] sm:$0xf]
    %v936 = vld [vmem:[%s5 + $0x38] sm:$0xf]
    %v937 = vld [vmem:[%s5 + $0x3c] sm:$0xf]
    %v938 = vld [vmem:[%s11 + $0x4] ss:$0 sm:$0xff]
    %v939 = vpack.c.bf16 %v921, %v920
    %v956 = vunpack.c.l.b16 %v922
    %v957 = vunpack.c.l.b16 %v923
    %v958 = vunpack.c.l.b16 %v924
    %v959 = vunpack.c.l.b16 %v925
    %v960 = vunpack.c.l.b16 %v926
    %v961 = vunpack.c.l.b16 %v927
    %v962 = vunpack.c.l.b16 %v928
    %v963 = vunpack.c.l.b16 %v929
    %v964 = vunpack.c.l.b16 %v930
    %v965 = vunpack.c.l.b16 %v931
    %v966 = vunpack.c.l.b16 %v932
    %v967 = vunpack.c.l.b16 %v933
    %v968 = vunpack.c.l.b16 %v934
    %v969 = vunpack.c.l.b16 %v935
    %v970 = vunpack.c.l.b16 %v936
    %v971 = vunpack.c.l.b16 %v937
    %v972 = vpack.c.b16 %v957, %v956
    %v973 = vpack.c.b16 %v959, %v958
    %v974 = vpack.c.b16 %v961, %v960
    %v975 = vpack.c.b16 %v963, %v962
    %v976 = vpack.c.b16 %v965, %v964
    %v977 = vpack.c.b16 %v967, %v966
    %v978 = vpack.c.b16 %v969, %v968
    %v979 = vpack.c.b16 %v971, %v970
    %988 = vmatpush.bf16.msra.mxu0 %v979
    %989 = vmatpush.bf16.msra.mxu0 %v978
    %990 = vmatpush.bf16.msra.mxu0 %v977
    %991 = vmatpush.bf16.msra.mxu0 %v976
    %992 = vmatpush.bf16.msra.mxu0 %v975
    %993 = vmatpush.bf16.msra.mxu0 %v974
    %994 = vmatpush.bf16.msra.mxu0 %v973
    %995 = vmatpush.bf16.msra.mxu0 %v972
    %996 = vmatmul.bf16.gmra.mxu0 %v939
    %v997 = vpop.f32.mrf.mxu0
    %v998 = vadd.f32 %v938, %v997
    %v999 = vpop.f32.mrf.mxu0
    %v1000 = vadd.f32 %v938, %v999
    %1001 = vdwg.mxu0
    %v1002 = vmax.f32 %v998, 0.0
    %v1003 = vmax.f32 %v1000, 0.0
    %vm1004 = vcmask 130048
    %1005 = vst.msk [vmem:[%s12] sm:$0xff] %vm1004, %v1002
    %1006 = vst.msk [vmem:[%s12 + $0x8] sm:$0xff] %vm1004, %v1003
    %v1007 = vld [vmem:[%s6] sm:$0xf]
    %v1008 = vld [vmem:[%s6 + $0x4] sm:$0xf]
    %v1009 = vld [vmem:[%s11 + $0x5] ss:$0 sm:$0xff]
    %v1010 = vpack.c.bf16 %v1003, %v1002
    %v1013 = vunpack.c.l.b16 %v1007
    %v1014 = vunpack.c.l.b16 %v1008
    %v1015 = vpack.c.b16 %v1014, %v1013
    %v1018 = vsel %vm1004, %v1010, 0
    %1020 = vmatpush.bf16.msra.mxu0 0
    %1021 = vmatpush.bf16.msra.mxu0 0
    %1022 = vmatpush.bf16.msra.mxu0 0
    %1023 = vmatpush.bf16.msra.mxu0 0
    %1024 = vmatpush.bf16.msra.mxu0 0
    %1025 = vmatpush.bf16.msra.mxu0 0
    %1026 = vmatpush.bf16.msra.mxu0 0
    %1027 = vmatpush.bf16.msra.mxu0 %v1015
    %1028 = vmatmul.bf16.gmra.mxu0 %v1018
    %v1029 = vpop.f32.mrf.mxu0
    %v1030 = vadd.f32 %v1009, %v1029
    %v1031 = vpop.f32.mrf.mxu0
    %v1032 = vadd.f32 %v1009, %v1031
    %1033 = vdwg.mxu0
    %v1034 = vmax.f32 %v1030, 0.0
    %v1035 = vmax.f32 %v1032, 0.0
    %v1036 = vld [vmem:[#allocation10] sm:$0xff]
    %v1037 = vld [vmem:[#allocation10 + $0x8] sm:$0xff]
    %v1038 = vld [vmem:[#allocation10 + $0x10] sm:$0xff]
    %v1039 = vld [vmem:[#allocation10 + $0x18] sm:$0xff]
    %v1040 = vld [vmem:[#allocation10 + $0x20] sm:$0xff]
    %v1041 = vld [vmem:[#allocation10 + $0x28] sm:$0xff]
    %v1042 = vld [vmem:[#allocation10 + $0x30] sm:$0xff]
    %v1043 = vld [vmem:[#allocation10 + $0x38] sm:$0xff]
    %v1044 = vld [vmem:[#allocation10 + $0x40] sm:$0xff]
    %v1045 = vld [vmem:[#allocation10 + $0x48] sm:$0xff]
    %v1046 = vld [vmem:[#allocation10 + $0x50] sm:$0xff]
    %v1047 = vld [vmem:[#allocation10 + $0x58] sm:$0xff]
    %v1048 = vld [vmem:[#allocation10 + $0x60] sm:$0xff]
    %v1049 = vld [vmem:[#allocation10 + $0x68] sm:$0xff]
    %v1050 = vld [vmem:[#allocation10 + $0x70] sm:$0xff]
    %v1051 = vld [vmem:[#allocation10 + $0x78] sm:$0xff]
    %s1052 = scalar_lea.vmem %s11, 6
    %v1053 = vld [vmem:[%s1052] ss:$8 sm:$0x3]
    %v1054 = vpack.c.bf16 %v1035, %v1034
    %v1056 = vperm.slane %v1053, 0
    %v1057 = vperm.slane %v1053, 1
    %v1076 = vunpack.c.l.b16 %v1036
    %v1077 = vunpack.c.h.b16 %v1036
    %v1078 = vunpack.c.l.b16 %v1037
    %v1079 = vunpack.c.h.b16 %v1037
    %v1080 = vunpack.c.l.b16 %v1038
    %v1081 = vunpack.c.h.b16 %v1038
    %v1082 = vunpack.c.l.b16 %v1039
    %v1083 = vunpack.c.h.b16 %v1039
    %v1084 = vunpack.c.l.b16 %v1040
    %v1085 = vunpack.c.h.b16 %v1040
    %v1086 = vunpack.c.l.b16 %v1041
    %v1087 = vunpack.c.h.b16 %v1041
    %v1088 = vunpack.c.l.b16 %v1042
    %v1089 = vunpack.c.h.b16 %v1042
    %v1090 = vunpack.c.l.b16 %v1043
    %v1091 = vunpack.c.h.b16 %v1043
    %v1092 = vunpack.c.l.b16 %v1044
    %v1093 = vunpack.c.h.b16 %v1044
    %v1094 = vunpack.c.l.b16 %v1045
    %v1095 = vunpack.c.h.b16 %v1045
    %v1096 = vunpack.c.l.b16 %v1046
    %v1097 = vunpack.c.h.b16 %v1046
    %v1098 = vunpack.c.l.b16 %v1047
    %v1099 = vunpack.c.h.b16 %v1047
    %v1100 = vunpack.c.l.b16 %v1048
    %v1101 = vunpack.c.h.b16 %v1048
    %v1102 = vunpack.c.l.b16 %v1049
    %v1103 = vunpack.c.h.b16 %v1049
    %v1104 = vunpack.c.l.b16 %v1050
    %v1105 = vunpack.c.h.b16 %v1050
    %v1106 = vunpack.c.l.b16 %v1051
    %v1107 = vunpack.c.h.b16 %v1051
    %v1108 = vpack.c.b16 %v1078, %v1076
    %v1109 = vpack.c.b16 %v1079, %v1077
    %v1110 = vpack.c.b16 %v1082, %v1080
    %v1111 = vpack.c.b16 %v1083, %v1081
    %v1112 = vpack.c.b16 %v1086, %v1084
    %v1113 = vpack.c.b16 %v1087, %v1085
    %v1114 = vpack.c.b16 %v1090, %v1088
    %v1115 = vpack.c.b16 %v1091, %v1089
    %v1116 = vpack.c.b16 %v1094, %v1092
    %v1117 = vpack.c.b16 %v1095, %v1093
    %v1118 = vpack.c.b16 %v1098, %v1096
    %v1119 = vpack.c.b16 %v1099, %v1097
    %v1120 = vpack.c.b16 %v1102, %v1100
    %v1121 = vpack.c.b16 %v1103, %v1101
    %v1122 = vpack.c.b16 %v1106, %v1104
    %v1123 = vpack.c.b16 %v1107, %v1105
    %1140 = vmatpush.bf16.msra.mxu0 %v1122
    %1141 = vmatpush.bf16.msra.mxu0 %v1120
    %1142 = vmatpush.bf16.msra.mxu0 %v1118
    %1143 = vmatpush.bf16.msra.mxu0 %v1116
    %1144 = vmatpush.bf16.msra.mxu0 %v1114
    %1145 = vmatpush.bf16.msra.mxu0 %v1112
    %1146 = vmatpush.bf16.msra.mxu0 %v1110
    %1147 = vmatpush.bf16.msra.mxu0 %v1108
    %1148 = vmatmul.bf16.gmra.mxu0 %v1054
    %v1149 = vpop.f32.mrf.mxu0
    %v1150 = vadd.f32 %v1056, %v1149
    %v1151 = vpop.f32.mrf.mxu0
    %v1152 = vadd.f32 %v1056, %v1151
    %1153 = vdwg.mxu0
    %1154 = vmatpush.bf16.msra.mxu0 %v1123
    %1155 = vmatpush.bf16.msra.mxu0 %v1121
    %1156 = vmatpush.bf16.msra.mxu0 %v1119
    %1157 = vmatpush.bf16.msra.mxu0 %v1117
    %1158 = vmatpush.bf16.msra.mxu0 %v1115
    %1159 = vmatpush.bf16.msra.mxu0 %v1113
    %1160 = vmatpush.bf16.msra.mxu0 %v1111
    %1161 = vmatpush.bf16.msra.mxu0 %v1109
    %1162 = vmatmul.bf16.gmra.mxu0 %v1054
    %v1163 = vpop.f32.mrf.mxu0
    %v1164 = vadd.f32 %v1057, %v1163
    %v1165 = vpop.f32.mrf.mxu0
    %v1166 = vadd.f32 %v1057, %v1165
    %1167 = vdwg.mxu0
    %v1168 = vmax.f32 %v1150, 0.0
    %v1169 = vmax.f32 %v1164, 0.0
    %v1170 = vmax.f32 %v1152, 0.0
    %v1171 = vmax.f32 %v1166, 0.0
    %v1172 = vld [vmem:[#allocation11] sm:$0xff]
    %v1173 = vld [vmem:[#allocation11 + $0x8] sm:$0xff]
    %v1174 = vld [vmem:[#allocation11 + $0x10] sm:$0xff]
    %v1175 = vld [vmem:[#allocation11 + $0x18] sm:$0xff]
    %v1176 = vld [vmem:[#allocation11 + $0x20] sm:$0xff]
    %v1177 = vld [vmem:[#allocation11 + $0x28] sm:$0xff]
    %v1178 = vld [vmem:[#allocation11 + $0x30] sm:$0xff]
    %v1179 = vld [vmem:[#allocation11 + $0x38] sm:$0xff]
    %v1180 = vld [vmem:[#allocation11 + $0x40] sm:$0xff]
    %v1181 = vld [vmem:[#allocation11 + $0x48] sm:$0xff]
    %v1182 = vld [vmem:[#allocation11 + $0x50] sm:$0xff]
    %v1183 = vld [vmem:[#allocation11 + $0x58] sm:$0xff]
    %v1184 = vld [vmem:[#allocation11 + $0x60] sm:$0xff]
    %v1185 = vld [vmem:[#allocation11 + $0x68] sm:$0xff]
    %v1186 = vld [vmem:[#allocation11 + $0x70] sm:$0xff]
    %v1187 = vld [vmem:[#allocation11 + $0x78] sm:$0xff]
    %v1188 = vld [vmem:[#allocation11 + $0x80] sm:$0xff]
    %v1189 = vld [vmem:[#allocation11 + $0x88] sm:$0xff]
    %v1190 = vld [vmem:[#allocation11 + $0x90] sm:$0xff]
    %v1191 = vld [vmem:[#allocation11 + $0x98] sm:$0xff]
    %v1192 = vld [vmem:[#allocation11 + $0xa0] sm:$0xff]
    %v1193 = vld [vmem:[#allocation11 + $0xa8] sm:$0xff]
    %v1194 = vld [vmem:[#allocation11 + $0xb0] sm:$0xff]
    %v1195 = vld [vmem:[#allocation11 + $0xb8] sm:$0xff]
    %v1196 = vld [vmem:[#allocation11 + $0xc0] sm:$0xff]
    %v1197 = vld [vmem:[#allocation11 + $0xc8] sm:$0xff]
    %v1198 = vld [vmem:[#allocation11 + $0xd0] sm:$0xff]
    %v1199 = vld [vmem:[#allocation11 + $0xd8] sm:$0xff]
    %v1200 = vld [vmem:[#allocation11 + $0xe0] sm:$0xff]
    %v1201 = vld [vmem:[#allocation11 + $0xe8] sm:$0xff]
    %v1202 = vld [vmem:[#allocation11 + $0xf0] sm:$0xff]
    %v1203 = vld [vmem:[#allocation11 + $0xf8] sm:$0xff]
    %s1204 = scalar_lea.vmem %s11, 7
    %v1205 = vld [vmem:[%s1204] ss:$8 sm:$0x3]
    %v1206 = vpack.c.bf16 %v1170, %v1168
    %v1207 = vpack.c.bf16 %v1171, %v1169
    %v1209 = vperm.slane %v1205, 0
    %v1210 = vperm.slane %v1205, 1
    %v1245 = vunpack.c.l.b16 %v1172
    %v1246 = vunpack.c.h.b16 %v1172
    %v1247 = vunpack.c.l.b16 %v1173
    %v1248 = vunpack.c.h.b16 %v1173
    %v1249 = vunpack.c.l.b16 %v1174
    %v1250 = vunpack.c.h.b16 %v1174
    %v1251 = vunpack.c.l.b16 %v1175
    %v1252 = vunpack.c.h.b16 %v1175
    %v1253 = vunpack.c.l.b16 %v1176
    %v1254 = vunpack.c.h.b16 %v1176
    %v1255 = vunpack.c.l.b16 %v1177
    %v1256 = vunpack.c.h.b16 %v1177
    %v1257 = vunpack.c.l.b16 %v1178
    %v1258 = vunpack.c.h.b16 %v1178
    %v1259 = vunpack.c.l.b16 %v1179
    %v1260 = vunpack.c.h.b16 %v1179
    %v1261 = vunpack.c.l.b16 %v1180
    %v1262 = vunpack.c.h.b16 %v1180
    %v1263 = vunpack.c.l.b16 %v1181
    %v1264 = vunpack.c.h.b16 %v1181
    %v1265 = vunpack.c.l.b16 %v1182
    %v1266 = vunpack.c.h.b16 %v1182
    %v1267 = vunpack.c.l.b16 %v1183
    %v1268 = vunpack.c.h.b16 %v1183
    %v1269 = vunpack.c.l.b16 %v1184
    %v1270 = vunpack.c.h.b16 %v1184
    %v1271 = vunpack.c.l.b16 %v1185
    %v1272 = vunpack.c.h.b16 %v1185
    %v1273 = vunpack.c.l.b16 %v1186
    %v1274 = vunpack.c.h.b16 %v1186
    %v1275 = vunpack.c.l.b16 %v1187
    %v1276 = vunpack.c.h.b16 %v1187
    %v1277 = vunpack.c.l.b16 %v1188
    %v1278 = vunpack.c.h.b16 %v1188
    %v1279 = vunpack.c.l.b16 %v1189
    %v1280 = vunpack.c.h.b16 %v1189
    %v1281 = vunpack.c.l.b16 %v1190
    %v1282 = vunpack.c.h.b16 %v1190
    %v1283 = vunpack.c.l.b16 %v1191
    %v1284 = vunpack.c.h.b16 %v1191
    %v1285 = vunpack.c.l.b16 %v1192
    %v1286 = vunpack.c.h.b16 %v1192
    %v1287 = vunpack.c.l.b16 %v1193
    %v1288 = vunpack.c.h.b16 %v1193
    %v1289 = vunpack.c.l.b16 %v1194
    %v1290 = vunpack.c.h.b16 %v1194
    %v1291 = vunpack.c.l.b16 %v1195
    %v1292 = vunpack.c.h.b16 %v1195
    %v1293 = vunpack.c.l.b16 %v1196
    %v1294 = vunpack.c.h.b16 %v1196
    %v1295 = vunpack.c.l.b16 %v1197
    %v1296 = vunpack.c.h.b16 %v1197
    %v1297 = vunpack.c.l.b16 %v1198
    %v1298 = vunpack.c.h.b16 %v1198
    %v1299 = vunpack.c.l.b16 %v1199
    %v1300 = vunpack.c.h.b16 %v1199
    %v1301 = vunpack.c.l.b16 %v1200
    %v1302 = vunpack.c.h.b16 %v1200
    %v1303 = vunpack.c.l.b16 %v1201
    %v1304 = vunpack.c.h.b16 %v1201
    %v1305 = vunpack.c.l.b16 %v1202
    %v1306 = vunpack.c.h.b16 %v1202
    %v1307 = vunpack.c.l.b16 %v1203
    %v1308 = vunpack.c.h.b16 %v1203
    %v1309 = vpack.c.b16 %v1247, %v1245
    %v1310 = vpack.c.b16 %v1248, %v1246
    %v1311 = vpack.c.b16 %v1251, %v1249
    %v1312 = vpack.c.b16 %v1252, %v1250
    %v1313 = vpack.c.b16 %v1255, %v1253
    %v1314 = vpack.c.b16 %v1256, %v1254
    %v1315 = vpack.c.b16 %v1259, %v1257
    %v1316 = vpack.c.b16 %v1260, %v1258
    %v1317 = vpack.c.b16 %v1263, %v1261
    %v1318 = vpack.c.b16 %v1264, %v1262
    %v1319 = vpack.c.b16 %v1267, %v1265
    %v1320 = vpack.c.b16 %v1268, %v1266
    %v1321 = vpack.c.b16 %v1271, %v1269
    %v1322 = vpack.c.b16 %v1272, %v1270
    %v1323 = vpack.c.b16 %v1275, %v1273
    %v1324 = vpack.c.b16 %v1276, %v1274
    %v1325 = vpack.c.b16 %v1279, %v1277
    %v1326 = vpack.c.b16 %v1280, %v1278
    %v1327 = vpack.c.b16 %v1283, %v1281
    %v1328 = vpack.c.b16 %v1284, %v1282
    %v1329 = vpack.c.b16 %v1287, %v1285
    %v1330 = vpack.c.b16 %v1288, %v1286
    %v1331 = vpack.c.b16 %v1291, %v1289
    %v1332 = vpack.c.b16 %v1292, %v1290
    %v1333 = vpack.c.b16 %v1295, %v1293
    %v1334 = vpack.c.b16 %v1296, %v1294
    %v1335 = vpack.c.b16 %v1299, %v1297
    %v1336 = vpack.c.b16 %v1300, %v1298
    %v1337 = vpack.c.b16 %v1303, %v1301
    %v1338 = vpack.c.b16 %v1304, %v1302
    %v1339 = vpack.c.b16 %v1307, %v1305
    %v1340 = vpack.c.b16 %v1308, %v1306
    %1373 = vmatpush.bf16.msra.mxu0 %v1323
    %1374 = vmatpush.bf16.msra.mxu0 %v1321
    %1375 = vmatpush.bf16.msra.mxu0 %v1319
    %1376 = vmatpush.bf16.msra.mxu0 %v1317
    %1377 = vmatpush.bf16.msra.mxu0 %v1315
    %1378 = vmatpush.bf16.msra.mxu0 %v1313
    %1379 = vmatpush.bf16.msra.mxu0 %v1311
    %1380 = vmatpush.bf16.msra.mxu0 %v1309
    %1381 = vmatmul.bf16.gmra.mxu0 %v1206
    %v1382 = vpop.f32.mrf.mxu0
    %v1383 = vadd.f32 %v1209, %v1382
    %v1384 = vpop.f32.mrf.mxu0
    %v1385 = vadd.f32 %v1209, %v1384
    %1386 = vdwg.mxu0
    %1387 = vmatpush.bf16.msra.mxu0 %v1339
    %1388 = vmatpush.bf16.msra.mxu0 %v1337
    %1389 = vmatpush.bf16.msra.mxu0 %v1335
    %1390 = vmatpush.bf16.msra.mxu0 %v1333
    %1391 = vmatpush.bf16.msra.mxu0 %v1331
    %1392 = vmatpush.bf16.msra.mxu0 %v1329
    %1393 = vmatpush.bf16.msra.mxu0 %v1327
    %1394 = vmatpush.bf16.msra.mxu0 %v1325
    %1395 = vmatmul.bf16.gmra.mxu0 %v1207
    %v1396 = vpop.f32.mrf.mxu0
    %v1397 = vadd.f32 %v1383, %v1396
    %v1398 = vpop.f32.mrf.mxu0
    %v1399 = vadd.f32 %v1385, %v1398
    %1400 = vdwg.mxu0
    %1401 = vmatpush.bf16.msra.mxu0 %v1324
    %1402 = vmatpush.bf16.msra.mxu0 %v1322
    %1403 = vmatpush.bf16.msra.mxu0 %v1320
    %1404 = vmatpush.bf16.msra.mxu0 %v1318
    %1405 = vmatpush.bf16.msra.mxu0 %v1316
    %1406 = vmatpush.bf16.msra.mxu0 %v1314
    %1407 = vmatpush.bf16.msra.mxu0 %v1312
    %1408 = vmatpush.bf16.msra.mxu0 %v1310
    %1409 = vmatmul.bf16.gmra.mxu0 %v1206
    %v1410 = vpop.f32.mrf.mxu0
    %v1411 = vadd.f32 %v1210, %v1410
    %v1412 = vpop.f32.mrf.mxu0
    %v1413 = vadd.f32 %v1210, %v1412
    %1414 = vdwg.mxu0
    %1415 = vmatpush.bf16.msra.mxu0 %v1340
    %1416 = vmatpush.bf16.msra.mxu0 %v1338
    %1417 = vmatpush.bf16.msra.mxu0 %v1336
    %1418 = vmatpush.bf16.msra.mxu0 %v1334
    %1419 = vmatpush.bf16.msra.mxu0 %v1332
    %1420 = vmatpush.bf16.msra.mxu0 %v1330
    %1421 = vmatpush.bf16.msra.mxu0 %v1328
    %1422 = vmatpush.bf16.msra.mxu0 %v1326
    %1423 = vmatmul.bf16.gmra.mxu0 %v1207
    %v1424 = vpop.f32.mrf.mxu0
    %v1425 = vadd.f32 %v1411, %v1424
    %v1426 = vpop.f32.mrf.mxu0
    %v1427 = vadd.f32 %v1413, %v1426
    %1428 = vdwg.mxu0
    %v1429 = vmax.f32 %v1397, 0.0
    %v1430 = vmax.f32 %v1425, 0.0
    %v1431 = vmax.f32 %v1399, 0.0
    %v1432 = vmax.f32 %v1427, 0.0
    %v1433 = vld [vmem:[#allocation13] sm:$0xff]
    %v1434 = vld [vmem:[#allocation13 + $0x8] sm:$0xff]
    %v1435 = vld [vmem:[#allocation13 + $0x10] sm:$0xff]
    %v1436 = vld [vmem:[#allocation13 + $0x18] sm:$0xff]
    %v1437 = vld [vmem:[#allocation13 + $0x20] sm:$0xff]
    %v1438 = vld [vmem:[#allocation13 + $0x28] sm:$0xff]
    %v1439 = vld [vmem:[#allocation13 + $0x30] sm:$0xff]
    %v1440 = vld [vmem:[#allocation13 + $0x38] sm:$0xff]
    %v1441 = vld [vmem:[#allocation13 + $0x40] sm:$0xff]
    %v1442 = vld [vmem:[#allocation13 + $0x48] sm:$0xff]
    %v1443 = vld [vmem:[#allocation13 + $0x50] sm:$0xff]
    %v1444 = vld [vmem:[#allocation13 + $0x58] sm:$0xff]
    %v1445 = vld [vmem:[#allocation13 + $0x60] sm:$0xff]
    %v1446 = vld [vmem:[#allocation13 + $0x68] sm:$0xff]
    %v1447 = vld [vmem:[#allocation13 + $0x70] sm:$0xff]
    %v1448 = vld [vmem:[#allocation13 + $0x78] sm:$0xff]
    %v1449 = vld [vmem:[#allocation13 + $0x80] sm:$0xff]
    %v1450 = vld [vmem:[#allocation13 + $0x88] sm:$0xff]
    %v1451 = vld [vmem:[#allocation13 + $0x90] sm:$0xff]
    %v1452 = vld [vmem:[#allocation13 + $0x98] sm:$0xff]
    %v1453 = vld [vmem:[#allocation13 + $0xa0] sm:$0xff]
    %v1454 = vld [vmem:[#allocation13 + $0xa8] sm:$0xff]
    %v1455 = vld [vmem:[#allocation13 + $0xb0] sm:$0xff]
    %v1456 = vld [vmem:[#allocation13 + $0xb8] sm:$0xff]
    %v1457 = vld [vmem:[#allocation13 + $0xc0] sm:$0xff]
    %v1458 = vld [vmem:[#allocation13 + $0xc8] sm:$0xff]
    %v1459 = vld [vmem:[#allocation13 + $0xd0] sm:$0xff]
    %v1460 = vld [vmem:[#allocation13 + $0xd8] sm:$0xff]
    %v1461 = vld [vmem:[#allocation13 + $0xe0] sm:$0xff]
    %v1462 = vld [vmem:[#allocation13 + $0xe8] sm:$0xff]
    %v1463 = vld [vmem:[#allocation13 + $0xf0] sm:$0xff]
    %v1464 = vld [vmem:[#allocation13 + $0xf8] sm:$0xff]
    %s1465 = scalar_lea.vmem %s11, 16
    %v1466 = vld [vmem:[%s1465] ss:$8 sm:$0x3]
    %v1467 = vpack.c.bf16 %v1431, %v1429
    %v1468 = vpack.c.bf16 %v1432, %v1430
    %v1470 = vperm.slane %v1466, 0
    %v1471 = vperm.slane %v1466, 1
    %v1506 = vunpack.c.l.b16 %v1433
    %v1507 = vunpack.c.h.b16 %v1433
    %v1508 = vunpack.c.l.b16 %v1434
    %v1509 = vunpack.c.h.b16 %v1434
    %v1510 = vunpack.c.l.b16 %v1435
    %v1511 = vunpack.c.h.b16 %v1435
    %v1512 = vunpack.c.l.b16 %v1436
    %v1513 = vunpack.c.h.b16 %v1436
    %v1514 = vunpack.c.l.b16 %v1437
    %v1515 = vunpack.c.h.b16 %v1437
    %v1516 = vunpack.c.l.b16 %v1438
    %v1517 = vunpack.c.h.b16 %v1438
    %v1518 = vunpack.c.l.b16 %v1439
    %v1519 = vunpack.c.h.b16 %v1439
    %v1520 = vunpack.c.l.b16 %v1440
    %v1521 = vunpack.c.h.b16 %v1440
    %v1522 = vunpack.c.l.b16 %v1441
    %v1523 = vunpack.c.h.b16 %v1441
    %v1524 = vunpack.c.l.b16 %v1442
    %v1525 = vunpack.c.h.b16 %v1442
    %v1526 = vunpack.c.l.b16 %v1443
    %v1527 = vunpack.c.h.b16 %v1443
    %v1528 = vunpack.c.l.b16 %v1444
    %v1529 = vunpack.c.h.b16 %v1444
    %v1530 = vunpack.c.l.b16 %v1445
    %v1531 = vunpack.c.h.b16 %v1445
    %v1532 = vunpack.c.l.b16 %v1446
    %v1533 = vunpack.c.h.b16 %v1446
    %v1534 = vunpack.c.l.b16 %v1447
    %v1535 = vunpack.c.h.b16 %v1447
    %v1536 = vunpack.c.l.b16 %v1448
    %v1537 = vunpack.c.h.b16 %v1448
    %v1538 = vunpack.c.l.b16 %v1449
    %v1539 = vunpack.c.h.b16 %v1449
    %v1540 = vunpack.c.l.b16 %v1450
    %v1541 = vunpack.c.h.b16 %v1450
    %v1542 = vunpack.c.l.b16 %v1451
    %v1543 = vunpack.c.h.b16 %v1451
    %v1544 = vunpack.c.l.b16 %v1452
    %v1545 = vunpack.c.h.b16 %v1452
    %v1546 = vunpack.c.l.b16 %v1453
    %v1547 = vunpack.c.h.b16 %v1453
    %v1548 = vunpack.c.l.b16 %v1454
    %v1549 = vunpack.c.h.b16 %v1454
    %v1550 = vunpack.c.l.b16 %v1455
    %v1551 = vunpack.c.h.b16 %v1455
    %v1552 = vunpack.c.l.b16 %v1456
    %v1553 = vunpack.c.h.b16 %v1456
    %v1554 = vunpack.c.l.b16 %v1457
    %v1555 = vunpack.c.h.b16 %v1457
    %v1556 = vunpack.c.l.b16 %v1458
    %v1557 = vunpack.c.h.b16 %v1458
    %v1558 = vunpack.c.l.b16 %v1459
    %v1559 = vunpack.c.h.b16 %v1459
    %v1560 = vunpack.c.l.b16 %v1460
    %v1561 = vunpack.c.h.b16 %v1460
    %v1562 = vunpack.c.l.b16 %v1461
    %v1563 = vunpack.c.h.b16 %v1461
    %v1564 = vunpack.c.l.b16 %v1462
    %v1565 = vunpack.c.h.b16 %v1462
    %v1566 = vunpack.c.l.b16 %v1463
    %v1567 = vunpack.c.h.b16 %v1463
    %v1568 = vunpack.c.l.b16 %v1464
    %v1569 = vunpack.c.h.b16 %v1464
    %v1570 = vpack.c.b16 %v1508, %v1506
    %v1571 = vpack.c.b16 %v1509, %v1507
    %v1572 = vpack.c.b16 %v1512, %v1510
    %v1573 = vpack.c.b16 %v1513, %v1511
    %v1574 = vpack.c.b16 %v1516, %v1514
    %v1575 = vpack.c.b16 %v1517, %v1515
    %v1576 = vpack.c.b16 %v1520, %v1518
    %v1577 = vpack.c.b16 %v1521, %v1519
    %v1578 = vpack.c.b16 %v1524, %v1522
    %v1579 = vpack.c.b16 %v1525, %v1523
    %v1580 = vpack.c.b16 %v1528, %v1526
    %v1581 = vpack.c.b16 %v1529, %v1527
    %v1582 = vpack.c.b16 %v1532, %v1530
    %v1583 = vpack.c.b16 %v1533, %v1531
    %v1584 = vpack.c.b16 %v1536, %v1534
    %v1585 = vpack.c.b16 %v1537, %v1535
    %v1586 = vpack.c.b16 %v1540, %v1538
    %v1587 = vpack.c.b16 %v1541, %v1539
    %v1588 = vpack.c.b16 %v1544, %v1542
    %v1589 = vpack.c.b16 %v1545, %v1543
    %v1590 = vpack.c.b16 %v1548, %v1546
    %v1591 = vpack.c.b16 %v1549, %v1547
    %v1592 = vpack.c.b16 %v1552, %v1550
    %v1593 = vpack.c.b16 %v1553, %v1551
    %v1594 = vpack.c.b16 %v1556, %v1554
    %v1595 = vpack.c.b16 %v1557, %v1555
    %v1596 = vpack.c.b16 %v1560, %v1558
    %v1597 = vpack.c.b16 %v1561, %v1559
    %v1598 = vpack.c.b16 %v1564, %v1562
    %v1599 = vpack.c.b16 %v1565, %v1563
    %v1600 = vpack.c.b16 %v1568, %v1566
    %v1601 = vpack.c.b16 %v1569, %v1567
    %1634 = vmatpush.bf16.msra.mxu0 %v1584
    %1635 = vmatpush.bf16.msra.mxu0 %v1582
    %1636 = vmatpush.bf16.msra.mxu0 %v1580
    %1637 = vmatpush.bf16.msra.mxu0 %v1578
    %1638 = vmatpush.bf16.msra.mxu0 %v1576
    %1639 = vmatpush.bf16.msra.mxu0 %v1574
    %1640 = vmatpush.bf16.msra.mxu0 %v1572
    %1641 = vmatpush.bf16.msra.mxu0 %v1570
    %1642 = vmatmul.bf16.gmra.mxu0 %v1467
    %v1643 = vpop.f32.mrf.mxu0
    %v1644 = vadd.f32 %v1470, %v1643
    %v1645 = vpop.f32.mrf.mxu0
    %v1646 = vadd.f32 %v1470, %v1645
    %1647 = vdwg.mxu0
    %1648 = vmatpush.bf16.msra.mxu0 %v1600
    %1649 = vmatpush.bf16.msra.mxu0 %v1598
    %1650 = vmatpush.bf16.msra.mxu0 %v1596
    %1651 = vmatpush.bf16.msra.mxu0 %v1594
    %1652 = vmatpush.bf16.msra.mxu0 %v1592
    %1653 = vmatpush.bf16.msra.mxu0 %v1590
    %1654 = vmatpush.bf16.msra.mxu0 %v1588
    %1655 = vmatpush.bf16.msra.mxu0 %v1586
    %1656 = vmatmul.bf16.gmra.mxu0 %v1468
    %v1657 = vpop.f32.mrf.mxu0
    %v1658 = vadd.f32 %v1644, %v1657
    %v1659 = vpop.f32.mrf.mxu0
    %v1660 = vadd.f32 %v1646, %v1659
    %1661 = vdwg.mxu0
    %1662 = vmatpush.bf16.msra.mxu0 %v1585
    %1663 = vmatpush.bf16.msra.mxu0 %v1583
    %1664 = vmatpush.bf16.msra.mxu0 %v1581
    %1665 = vmatpush.bf16.msra.mxu0 %v1579
    %1666 = vmatpush.bf16.msra.mxu0 %v1577
    %1667 = vmatpush.bf16.msra.mxu0 %v1575
    %1668 = vmatpush.bf16.msra.mxu0 %v1573
    %1669 = vmatpush.bf16.msra.mxu0 %v1571
    %1670 = vmatmul.bf16.gmra.mxu0 %v1467
    %v1671 = vpop.f32.mrf.mxu0
    %v1672 = vadd.f32 %v1471, %v1671
    %v1673 = vpop.f32.mrf.mxu0
    %v1674 = vadd.f32 %v1471, %v1673
    %1675 = vdwg.mxu0
    %1676 = vmatpush.bf16.msra.mxu0 %v1601
    %1677 = vmatpush.bf16.msra.mxu0 %v1599
    %1678 = vmatpush.bf16.msra.mxu0 %v1597
    %1679 = vmatpush.bf16.msra.mxu0 %v1595
    %1680 = vmatpush.bf16.msra.mxu0 %v1593
    %1681 = vmatpush.bf16.msra.mxu0 %v1591
    %1682 = vmatpush.bf16.msra.mxu0 %v1589
    %1683 = vmatpush.bf16.msra.mxu0 %v1587
    %1684 = vmatmul.bf16.gmra.mxu0 %v1468
    %v1685 = vpop.f32.mrf.mxu0
    %v1686 = vadd.f32 %v1672, %v1685
    %v1687 = vpop.f32.mrf.mxu0
    %v1688 = vadd.f32 %v1674, %v1687
    %1689 = vdwg.mxu0
    %v1690 = vmax.f32 %v1658, 0.0
    %v1691 = vmax.f32 %v1686, 0.0
    %v1692 = vmax.f32 %v1660, 0.0
    %v1693 = vmax.f32 %v1688, 0.0
    %v1694 = vld [vmem:[#allocation14] sm:$0xf]
    %v1695 = vld [vmem:[#allocation14 + $0x4] sm:$0xf]
    %v1696 = vld [vmem:[#allocation14 + $0x8] sm:$0xf]
    %v1697 = vld [vmem:[#allocation14 + $0xc] sm:$0xf]
    %v1698 = vld [vmem:[#allocation14 + $0x10] sm:$0xf]
    %v1699 = vld [vmem:[#allocation14 + $0x14] sm:$0xf]
    %v1700 = vld [vmem:[#allocation14 + $0x18] sm:$0xf]
    %v1701 = vld [vmem:[#allocation14 + $0x1c] sm:$0xf]
    %v1702 = vld [vmem:[#allocation14 + $0x20] sm:$0xf]
    %v1703 = vld [vmem:[#allocation14 + $0x24] sm:$0xf]
    %v1704 = vld [vmem:[#allocation14 + $0x28] sm:$0xf]
    %v1705 = vld [vmem:[#allocation14 + $0x2c] sm:$0xf]
    %v1706 = vld [vmem:[#allocation14 + $0x30] sm:$0xf]
    %v1707 = vld [vmem:[#allocation14 + $0x34] sm:$0xf]
    %v1708 = vld [vmem:[#allocation14 + $0x38] sm:$0xf]
    %v1709 = vld [vmem:[#allocation14 + $0x3c] sm:$0xf]
    %v1710 = vld [vmem:[#allocation14 + $0x40] sm:$0xf]
    %v1711 = vld [vmem:[#allocation14 + $0x44] sm:$0xf]
    %v1712 = vld [vmem:[#allocation14 + $0x48] sm:$0xf]
    %v1713 = vld [vmem:[#allocation14 + $0x4c] sm:$0xf]
    %v1714 = vld [vmem:[#allocation14 + $0x50] sm:$0xf]
    %v1715 = vld [vmem:[#allocation14 + $0x54] sm:$0xf]
    %v1716 = vld [vmem:[#allocation14 + $0x58] sm:$0xf]
    %v1717 = vld [vmem:[#allocation14 + $0x5c] sm:$0xf]
    %v1718 = vld [vmem:[#allocation14 + $0x60] sm:$0xf]
    %v1719 = vld [vmem:[#allocation14 + $0x64] sm:$0xf]
    %v1720 = vld [vmem:[#allocation14 + $0x68] sm:$0xf]
    %v1721 = vld [vmem:[#allocation14 + $0x6c] sm:$0xf]
    %v1722 = vld [vmem:[#allocation14 + $0x70] sm:$0xf]
    %v1723 = vld [vmem:[#allocation14 + $0x74] sm:$0xf]
    %v1724 = vld [vmem:[#allocation14 + $0x78] sm:$0xf]
    %v1725 = vld [vmem:[#allocation14 + $0x7c] sm:$0xf]
    %v1726 = vld [vmem:[%s11 + $0x11] ss:$0 sm:$0xff]
    %v1727 = vpack.c.bf16 %v1692, %v1690
    %v1728 = vpack.c.bf16 %v1693, %v1691
    %v1761 = vunpack.c.l.b16 %v1694
    %v1762 = vunpack.c.l.b16 %v1695
    %v1763 = vunpack.c.l.b16 %v1696
    %v1764 = vunpack.c.l.b16 %v1697
    %v1765 = vunpack.c.l.b16 %v1698
    %v1766 = vunpack.c.l.b16 %v1699
    %v1767 = vunpack.c.l.b16 %v1700
    %v1768 = vunpack.c.l.b16 %v1701
    %v1769 = vunpack.c.l.b16 %v1702
    %v1770 = vunpack.c.l.b16 %v1703
    %v1771 = vunpack.c.l.b16 %v1704
    %v1772 = vunpack.c.l.b16 %v1705
    %v1773 = vunpack.c.l.b16 %v1706
    %v1774 = vunpack.c.l.b16 %v1707
    %v1775 = vunpack.c.l.b16 %v1708
    %v1776 = vunpack.c.l.b16 %v1709
    %v1777 = vunpack.c.l.b16 %v1710
    %v1778 = vunpack.c.l.b16 %v1711
    %v1779 = vunpack.c.l.b16 %v1712
    %v1780 = vunpack.c.l.b16 %v1713
    %v1781 = vunpack.c.l.b16 %v1714
    %v1782 = vunpack.c.l.b16 %v1715
    %v1783 = vunpack.c.l.b16 %v1716
    %v1784 = vunpack.c.l.b16 %v1717
    %v1785 = vunpack.c.l.b16 %v1718
    %v1786 = vunpack.c.l.b16 %v1719
    %v1787 = vunpack.c.l.b16 %v1720
    %v1788 = vunpack.c.l.b16 %v1721
    %v1789 = vunpack.c.l.b16 %v1722
    %v1790 = vunpack.c.l.b16 %v1723
    %v1791 = vunpack.c.l.b16 %v1724
    %v1792 = vunpack.c.l.b16 %v1725
    %v1793 = vpack.c.b16 %v1762, %v1761
    %v1794 = vpack.c.b16 %v1764, %v1763
    %v1795 = vpack.c.b16 %v1766, %v1765
    %v1796 = vpack.c.b16 %v1768, %v1767
    %v1797 = vpack.c.b16 %v1770, %v1769
    %v1798 = vpack.c.b16 %v1772, %v1771
    %v1799 = vpack.c.b16 %v1774, %v1773
    %v1800 = vpack.c.b16 %v1776, %v1775
    %v1801 = vpack.c.b16 %v1778, %v1777
    %v1802 = vpack.c.b16 %v1780, %v1779
    %v1803 = vpack.c.b16 %v1782, %v1781
    %v1804 = vpack.c.b16 %v1784, %v1783
    %v1805 = vpack.c.b16 %v1786, %v1785
    %v1806 = vpack.c.b16 %v1788, %v1787
    %v1807 = vpack.c.b16 %v1790, %v1789
    %v1808 = vpack.c.b16 %v1792, %v1791
    %1825 = vmatpush.bf16.msra.mxu0 %v1800
    %1826 = vmatpush.bf16.msra.mxu0 %v1799
    %1827 = vmatpush.bf16.msra.mxu0 %v1798
    %1828 = vmatpush.bf16.msra.mxu0 %v1797
    %1829 = vmatpush.bf16.msra.mxu0 %v1796
    %1830 = vmatpush.bf16.msra.mxu0 %v1795
    %1831 = vmatpush.bf16.msra.mxu0 %v1794
    %1832 = vmatpush.bf16.msra.mxu0 %v1793
    %1833 = vmatmul.bf16.gmra.mxu0 %v1727
    %v1834 = vpop.f32.mrf.mxu0
    %v1835 = vadd.f32 %v1726, %v1834
    %v1836 = vpop.f32.mrf.mxu0
    %v1837 = vadd.f32 %v1726, %v1836
    %1838 = vdwg.mxu0
    %1839 = vmatpush.bf16.msra.mxu0 %v1808
    %1840 = vmatpush.bf16.msra.mxu0 %v1807
    %1841 = vmatpush.bf16.msra.mxu0 %v1806
    %1842 = vmatpush.bf16.msra.mxu0 %v1805
    %1843 = vmatpush.bf16.msra.mxu0 %v1804
    %1844 = vmatpush.bf16.msra.mxu0 %v1803
    %1845 = vmatpush.bf16.msra.mxu0 %v1802
    %1846 = vmatpush.bf16.msra.mxu0 %v1801
    %1847 = vmatmul.bf16.gmra.mxu0 %v1728
    %v1848 = vpop.f32.mrf.mxu0
    %v1849 = vadd.f32 %v1835, %v1848
    %v1850 = vpop.f32.mrf.mxu0
    %v1851 = vadd.f32 %v1837, %v1850
    %1852 = vdwg.mxu0
    %v1853 = vxor.u32 %v1849, 2147483648
    %v1854 = vxor.u32 %v1851, 2147483648
    %v1855 = vmul.f32 %v1853, 1.442695
    %v1856 = vpow.pop %v1855
    %v1857 = vmul.f32 %v1854, 1.442695
    %v1858 = vpow.pop %v1857
    %v1859 = vadd.f32 %v1856, 1.0
    %v1860 = vadd.f32 %v1858, 1.0
    %v1861 = vrcp.pop %v1859
    %v1862 = vmul.f32 %v1859, %v1861
    %v1863 = vsub.f32 1.0, %v1862
    %v1864 = vmul.f32 %v1861, %v1863
    %v1865 = vadd.f32 %v1861, %v1864
    %vm1866 = vweird.f32 %v1859
    %vm1867 = vweird.f32 %v1861
    %vm1868 = vmor %vm1866, %vm1867
    %v1869 = vsel %vm1868, %v1861, %v1865
    %v1870 = vand.u32 2147483647, %v1859
    %vm1871 = vcmp.eq.f32.partialorder %v1870, 8.507059e+37
    %v1872 = vand.u32 %v1859, 2147483648
    %v1873 = vor.u32 1.1754944e-38, %v1872
    %v1874 = vsel %vm1871, %v1873, %v1869
    %v1875 = vmul.f32 1.0, %v1874
    %v1876 = vrcp.pop %v1860
    %v1877 = vmul.f32 %v1860, %v1876
    %v1878 = vsub.f32 1.0, %v1877
    %v1879 = vmul.f32 %v1876, %v1878
    %v1880 = vadd.f32 %v1876, %v1879
    %vm1881 = vweird.f32 %v1860
    %vm1882 = vweird.f32 %v1876
    %vm1883 = vmor %vm1881, %vm1882
    %v1884 = vsel %vm1883, %v1876, %v1880
    %v1885 = vand.u32 2147483647, %v1860
    %vm1886 = vcmp.eq.f32.partialorder %v1885, 8.507059e+37
    %v1887 = vand.u32 %v1860, 2147483648
    %v1888 = vor.u32 1.1754944e-38, %v1887
    %v1889 = vsel %vm1886, %v1888, %v1884
    %v1890 = vmul.f32 1.0, %v1889
    %1891 = vst [vmem:[#allocation16] sm:$0xff] %v1875
    %1892 = vst [vmem:[#allocation16 + $0x8] sm:$0xff] %v1890
    // Predicated region
    $region82: #{forward.1} parent=1 // pred_check
      _
    $region83: #{forward.1} parent=1 // pred_check_branch
      %1894 = sbr.rel (0) target = $region85
    $region84: #{forward.1} parent=1 // pred_region
      _
    $region85: #{forward.1} parent=1 // pred_fallthru
      _
    // Predicated region
    $region86: #{forward.1} parent=1 // pred_check
      _
    $region87: #{forward.1} parent=1 // pred_check_branch
      %1896 = sbr.rel (0) target = $region89
    $region88: #{forward.1} parent=1 // pred_region
      %1898 = vsyncadd [#allocation4], 0
      %s1899 = sshll.u32 [#allocation16], 4
      %s1900 = int_to_ptr.vmem [resolvable:$true] %s1899
      %s1901 = sshll.u32 %s13, 4
      %s1902 = int_to_ptr.hbm [resolvable:$true] %s1901
      %1907 = dma.vmem_to_hbm [thread:$0]  %s1900, 256, %s1902, [#allocation4], 128, 128, 8
    $region89: #{forward.1} parent=1 // pred_fallthru
      _
    // Predicated region
    $region90: #{forward.1} parent=1 // pred_check
      _
    $region91: #{forward.1} parent=1 // pred_check_branch
      %1909 = sbr.rel (0) target = $region93
    $region92: #{forward.1} parent=1 // pred_region
      _
    $region93: #{forward.1} parent=1 // pred_fallthru
      _
    // Predicated region
    $region94: #{forward.1} parent=1 // pred_check
      _
    $region95: #{forward.1} parent=1 // pred_check_branch
      %1911 = sbr.rel (0) target = $region97
    $region96: #{forward.1} parent=1 // pred_region
      %1913 = dma.done [#allocation4], 256
    $region97: #{forward.1} parent=1 // pred_fallthru
      _
    %1914 = vsyncpa [#allocation3], 1
    %1915 = vsyncpa [#allocation6], 1
    %1916 = vsyncpa [#allocation9], 1
    %1917 = vsyncpa [#allocation12], 1
    %1918 = vsyncpa [#allocation15], 1
    %1919 = vsyncpa [#allocation4], 1

</llo_original>
